<compile_context>
chip_gen: v7x
topology: tpu7x:2x2x1
jax: 0.10.0
libtpu: 0.0.40
codegen_flags: <defaults>
</compile_context>

<pallas_src>
import math

import jax
import jax.numpy as jnp
from jax import lax
from jax.experimental import pallas as pl
from jax.experimental.pallas import tpu as pltpu


# --------------------------------------------------------------------------- #
# Pallas flash-attention kernel (QKVAttentionLegacy core)
# --------------------------------------------------------------------------- #
def _flash_attn_kernel(q_ref, k_ref, v_ref, o_ref, qbf_sc, m_sc, l_sc, acc_sc):
    """One (head-block, q-tile, kv-tile) grid step of online-softmax attention.

    q_ref  : (Hb, ch, tq)        k_ref / v_ref : (Hb, ch, tkv)
    o_ref  : (Hb, ch, tq)
    qbf_sc : (Hb, ch, tq)  bf16  pre-scaled q (written once per q-tile)
    m_sc   : (Hb, 1,  tq)  f32   running max
    l_sc   : (Hb, 1,  tq)  f32   running softmax denominator
    acc_sc : (Hb, ch, tq)  f32   running (unnormalized) output, channels-first
    """
    kv_i = pl.program_id(2)
    hb, ch, _ = q_ref.shape
    scale = 1.0 / math.sqrt(ch)   # == (1/ch**0.25) applied to both q and k

    @pl.when(kv_i == 0)
    def _init():
        m_sc[...] = jnp.full_like(m_sc, -jnp.inf)
        l_sc[...] = jnp.zeros_like(l_sc)
        acc_sc[...] = jnp.zeros_like(acc_sc)
        # Scale folded into q once per q-tile; cast to bf16 for the MXU.
        qbf_sc[...] = (q_ref[...].astype(jnp.float32) * scale).astype(qbf_sc.dtype)

    # Small, bounded per-head unroll (hb <= 4): back-to-back MXU passes.
    for h in range(hb):
        q = qbf_sc[h]                               # (ch, tq)  bf16, pre-scaled
        k = k_ref[h].astype(jnp.bfloat16)           # (ch, tkv) bf16
        v = v_ref[h].astype(jnp.bfloat16)           # (ch, tkv) bf16

        # s[s', t] = sum_c k[c, s'] * q[c, t]  -> (tkv, tq); lane dim = tq.
        # Transposed-lhs contraction is consumed via dimension_numbers; no XLU
        # transpose is materialized and f32 accumulation happens on the MXU.
        s = lax.dot_general(k, q, (((0,), (0,)), ((), ())),
                            preferred_element_type=jnp.float32)     # (tkv, tq)

        m_prev = m_sc[h]                                             # (1, tq)
        m_new = jnp.maximum(m_prev, jnp.max(s, axis=0, keepdims=True))
        alpha = jnp.exp(m_prev - m_new)                              # (1, tq)
        p = jnp.exp(s - m_new)                                       # (tkv, tq) f32

        l_sc[h] = alpha * l_sc[h] + jnp.sum(p, axis=0, keepdims=True)
        m_sc[h] = m_new

        # pv[c, t] = sum_s' v[c, s'] * p[s', t]  -> (ch, tq); probabilities cast
        # to bf16 only at the MXU boundary (softmax math stays in f32).
        pv = lax.dot_general(v, p.astype(jnp.bfloat16),
                             (((1,), (0,)), ((), ())),
                             preferred_element_type=jnp.float32)     # (ch, tq)

        acc_sc[h] = acc_sc[h] * alpha + pv           # lane-dense update

    @pl.when(kv_i == pl.num_programs(2) - 1)
    def _finalize():
        # Exact normalization; output store is channels-first and lane-dense.
        o_ref[...] = (acc_sc[...] / l_sc[...]).astype(o_ref.dtype)


# --------------------------------------------------------------------------- #
# Generation-aware tile / VMEM heuristics
# --------------------------------------------------------------------------- #
def _tpu_vmem_capacity_bytes():
    try:
        return int(pltpu.get_tpu_info().vmem_capacity_bytes)
    except Exception:
        return 64 * 1024 * 1024          # v7x-safe fallback


def _pick_seq_tile(T, target):
    """Largest multiple of 128 that divides T and is <= target, else full T."""
    if T % 128 != 0:
        return T                         # full-extent block is always legal
    cand = max(min((target // 128) * 128, T), 128)
    while cand > 128 and T % cand != 0:
        cand -= 128
    return cand if T % cand == 0 else T


def _vmem_bytes_estimate(hb, ch, tq, tkv, itemsize):
    dbl = 2                                   # Pallas double-buffers each block
    q_b = hb * ch * tq * itemsize * dbl
    kv_b = 2 * hb * ch * tkv * itemsize * dbl
    o_b = hb * ch * tq * itemsize * dbl
    qbf_b = hb * ch * tq * 2                  # bf16 pre-scaled q scratch
    acc_b = hb * ch * tq * 4
    ml_b = 2 * hb * 8 * tq * 4                # (hb, 1, tq) pads to 8 sublanes
    # Per-head temporaries (s f32, p f32, p bf16, k/v bf16 casts) counted for ALL
    # hb heads: the static unroll does not bound live ranges.
    tmp_b = hb * (tq * tkv * (4 + 4 + 2) + 2 * ch * tkv * 2)
    return q_b + kv_b + o_b + qbf_b + acc_b + ml_b + tmp_b


def _pick_head_block(B, T, tq, ch, tkv, itemsize, budget_bytes, max_heads=4):
    hb = 1
    for cand in range(2, min(B, max_heads) + 1):
        if B % cand != 0:
            continue
        # Keep both v7x TensorCores busy: parallel grid product must stay >= 2.
        if (B // cand) * (T // tq) < 2:
            continue
        if _vmem_bytes_estimate(cand, ch, tq, tkv, itemsize) <= budget_bytes:
            hb = cand
    return hb


# --------------------------------------------------------------------------- #
# QKVAttentionLegacy wrapper
# --------------------------------------------------------------------------- #
def qkv_attention_legacy(qkv, n_heads, *, q_tile=512, kv_tile=2048):
    """QKVAttentionLegacy.forward:  qkv [N, H*3*C, T]  ->  [N, H*C, T]."""
    # TODO(synk): optional encoder_kv cross-attention path not implemented.
    bs, width, length = qkv.shape
    assert width % (3 * n_heads) == 0
    ch = width // (3 * n_heads)
    B = bs * n_heads
    T = length

    itemsize = jnp.dtype(qkv.dtype).itemsize
    min_sublane = 8 * max(1, 4 // itemsize)          # 8 for f32, 16 for bf16
    assert ch % min_sublane == 0, (
        f"head dim {ch} must be a multiple of {min_sublane} for {qkv.dtype}")

    qkv_r = qkv.reshape(B, 3 * ch, T)

    # Generation-aware VMEM budget (v5e/v6e: 128 MiB, v7x: 64 MiB per core).
    capacity = _tpu_vmem_capacity_bytes()
    vmem_limit = max(min(int(capacity * 0.75), capacity - (8 << 20)), 16 << 20)
    budget = int(vmem_limit * 0.7)

    tq = _pick_seq_tile(T, q_tile)
    tkv = _pick_seq_tile(T, kv_tile)     # tkv == T whenever it fits -> kv axis = 1
    if T % 128 == 0:
        while tkv > 128 and _vmem_bytes_estimate(1, ch, tq, tkv, itemsize) > budget:
            tkv = _pick_seq_tile(T, tkv - 128)
        while tq > 128 and _vmem_bytes_estimate(1, ch, tq, tkv, itemsize) > budget:
            tq = _pick_seq_tile(T, tq - 128)
    # TODO(synk): T not divisible by 128 falls back to full-extent (T, T) tiles.

    hb = _pick_head_block(B, T, tq, ch, tkv, itemsize, budget)

    grid = (B // hb, T // tq, T // tkv)

    vmem_est = _vmem_bytes_estimate(hb, ch, tq, tkv, itemsize)
    vmem_limit = int(min(max(vmem_limit, vmem_est + (4 << 20)),
                         int(capacity * 0.9)))

    out = pl.pallas_call(
        _flash_attn_kernel,
        out_shape=jax.ShapeDtypeStruct((B, ch, T), qkv.dtype),
        grid_spec=pltpu.PrefetchScalarGridSpec(
            num_scalar_prefetch=0,
            grid=grid,
            # q/k/v are three channel-block views over the same qkv array
            # (block index 0/1/2 along the 3*ch axis): no wrapper-side split.
            in_specs=[
                pl.BlockSpec((hb, ch, tq), lambda bi, qi, ki: (bi, 0, qi)),   # Q
                pl.BlockSpec((hb, ch, tkv), lambda bi, qi, ki: (bi, 1, ki)),  # K
                pl.BlockSpec((hb, ch, tkv), lambda bi, qi, ki: (bi, 2, ki)),  # V
            ],
            out_specs=pl.BlockSpec((hb, ch, tq), lambda bi, qi, ki: (bi, 0, qi)),
            scratch_shapes=[
                pltpu.VMEM((hb, ch, tq), jnp.bfloat16),  # pre-scaled q (bf16)
                pltpu.VMEM((hb, 1, tq), jnp.float32),    # running max m
                pltpu.VMEM((hb, 1, tq), jnp.float32),    # running denom l
                pltpu.VMEM((hb, ch, tq), jnp.float32),   # running output acc
            ],
        ),
        compiler_params=pltpu.CompilerParams(
            dimension_semantics=("parallel", "parallel", "arbitrary"),
            vmem_limit_bytes=vmem_limit,
        ),
    )(qkv_r, qkv_r, qkv_r)

    return out.reshape(bs, n_heads * ch, T)


# --------------------------------------------------------------------------- #
# AttentionBlock forward (GroupNorm + 1x1 convs + residual in jnp)
# --------------------------------------------------------------------------- #
def _group_norm(x, gamma, beta, num_groups=32, eps=1e-5):
    # GroupNorm32: math in f32, cast back.  x: [N, C, T]
    n, c, t = x.shape
    xf = x.astype(jnp.float32).reshape(n, num_groups, c // num_groups, t)
    mean = jnp.mean(xf, axis=(2, 3), keepdims=True)
    var = jnp.var(xf, axis=(2, 3), keepdims=True)
    xf = ((xf - mean) * lax.rsqrt(var + eps)).reshape(n, c, t)
    out = (xf * gamma.astype(jnp.float32)[None, :, None]
           + beta.astype(jnp.float32)[None, :, None])
    return out.astype(x.dtype)


def _conv1x1(x, w, b):
    # 1x1 Conv1d:  x [N, Cin, T], w [Cout, Cin], b [Cout]
    return jnp.einsum('oc,nct->not', w, x) + b[None, :, None]


def attention_block_forward(x, params, num_heads, *, q_tile=512, kv_tile=2048):
    """AttentionBlock._forward (cross_attn=None path)."""
    # TODO(synk): cross_attn / encoder_kv path and use_checkpoint not implemented.
    b, c = x.shape[0], x.shape[1]
    x_flat = x.reshape(b, c, -1)
    h = _group_norm(x_flat, params['norm_w'], params['norm_b'])
    qkv = _conv1x1(h, params['qkv_w'], params['qkv_b'])
    a = qkv_attention_legacy(qkv, num_heads, q_tile=q_tile, kv_tile=kv_tile)
    h = _conv1x1(a, params['proj_w'], params['proj_b'])
    return (x_flat + h).reshape(x.shape)


# --------------------------------------------------------------------------- #
# Pure-JAX references (mirror the PyTorch module, f32 math)
# --------------------------------------------------------------------------- #
def _attention_reference(qkv, n_heads):
    bs, width, length = qkv.shape
    ch = width // (3 * n_heads)
    x = qkv.reshape(bs * n_heads, 3 * ch, length)
    q, k, v = x[:, :ch], x[:, ch:2 * ch], x[:, 2 * ch:]
    scale = 1.0 / math.sqrt(math.sqrt(ch))
    w = jnp.einsum('bct,bcs->bts', q * scale, k * scale)
    w = jax.nn.softmax(w.astype(jnp.float32), axis=-1).astype(qkv.dtype)
    a = jnp.einsum('bts,bcs->bct', w, v)
    return a.reshape(bs, -1, length)


def _attention_block_reference(x, params, num_heads):
    b, c = x.shape[0], x.shape[1]
    x_flat = x.reshape(b, c, -1)
    h = _group_norm(x_flat, params['norm_w'], params['norm_b'])
    qkv = _conv1x1(h, params['qkv_w'], params['qkv_b'])
    a = _attention_reference(qkv, num_heads)
    h = _conv1x1(a, params['proj_w'], params['proj_b'])
    return (x_flat + h).reshape(x.shape)


# --------------------------------------------------------------------------- #
# Test
# --------------------------------------------------------------------------- #
if __name__ == "__main__":
    # Small AttentionBlock config: channels=64 (32 GroupNorm groups), 2 heads
    # (head dim 32), 16x16 spatial -> T=256.
    N, C, HH, WW = 2, 64, 16, 16
    num_heads = 2

    key = jax.random.PRNGKey(0)
    kx, kq, kqb, kp, kpb = jax.random.split(key, 5)

    x = jax.random.normal(kx, (N, C, HH, WW), dtype=jnp.float32)

    params = {
        'norm_w': jnp.ones((C,), jnp.float32),     # GroupNorm default init
        'norm_b': jnp.zeros((C,), jnp.float32),
        'qkv_w': 0.05 * jax.random.normal(kq, (3 * C, C), jnp.float32),
        'qkv_b': 0.02 * jax.random.normal(kqb, (3 * C,), jnp.float32),
        # NOTE: the module zero-initializes proj_out; small non-zero weights
        # (a valid trained state) are used here so the attention path actually
        # affects the output and the check is non-trivial.
        'proj_w': 0.05 * jax.random.normal(kp, (C, C), jnp.float32),
        'proj_b': 0.02 * jax.random.normal(kpb, (C,), jnp.float32),
    }

    # Tolerance: the kernel feeds the MXU bf16 operands (f32 accumulation), so
    # results differ from the all-f32 reference by a few 1e-3 relative.
    ATOL = RTOL = 1e-2

    # 1) Attention core: Pallas kernel vs pure-JAX reference on the real qkv.
    #    Exercise both the multi-kv-tile flash path and the single-tile path.
    x_flat = x.reshape(N, C, -1)
    qkv = _conv1x1(_group_norm(x_flat, params['norm_w'], params['norm_b']),
                   params['qkv_w'], params['qkv_b'])
    a_ref = _attention_reference(qkv, num_heads)

    a_tiled = jax.block_until_ready(
        qkv_attention_legacy(qkv, num_heads, q_tile=128, kv_tile=128))
    a_full = jax.block_until_ready(
        qkv_attention_legacy(qkv, num_heads))     # default targets -> kv axis = 1

    assert a_tiled.shape == (N, C, HH * WW), a_tiled.shape
    assert jnp.allclose(a_tiled, a_ref, atol=ATOL, rtol=RTOL), \
        float(jnp.max(jnp.abs(a_tiled - a_ref)))
    assert jnp.allclose(a_full, a_ref, atol=ATOL, rtol=RTOL), \
        float(jnp.max(jnp.abs(a_full - a_ref)))

    # 2) Full AttentionBlock forward vs reference.
    out = jax.block_until_ready(
        attention_block_forward(x, params, num_heads, q_tile=128, kv_tile=128))
    out_ref = _attention_block_reference(x, params, num_heads)
    assert out.shape == x.shape, out.shape
    assert jnp.allclose(out, out_ref, atol=ATOL, rtol=RTOL), \
        float(jnp.max(jnp.abs(out - out_ref)))

    print("KERNEL_OK")
</pallas_src>

<mosaic_0001>
module attributes {stable_mosaic.version = 11 : i64} {
  func.func @_flash_attn_kernel(%arg0: i32, %arg1: i32, %arg2: i32, %arg3: memref<4x32x128xf32, #tpu.memory_space<vmem>>, %arg4: memref<4x32x128xf32, #tpu.memory_space<vmem>>, %arg5: memref<4x32x128xf32, #tpu.memory_space<vmem>>, %arg6: memref<4x32x128xf32, #tpu.memory_space<vmem>>, %arg7: memref<4x32x128xbf16, #tpu.memory_space<vmem>>, %arg8: memref<4x1x128xf32, #tpu.memory_space<vmem>>, %arg9: memref<4x1x128xf32, #tpu.memory_space<vmem>>, %arg10: memref<4x32x128xf32, #tpu.memory_space<vmem>>) attributes {dimension_semantics = [#tpu.dimension_semantics<parallel>, #tpu.dimension_semantics<parallel>, #tpu.dimension_semantics<arbitrary>], iteration_bounds = array<i64: 1, 2, 2>, scalar_prefetch = 0 : i64, scratch_operands = 4 : i64, tpu.core_type = #tpu.core_type<tc>, window_params = [{transform_indices = @transform_0, window_bounds = array<i64: 4, 32, 128>}, {transform_indices = @transform_1, window_bounds = array<i64: 4, 32, 128>}, {transform_indices = @transform_2, window_bounds = array<i64: 4, 32, 128>}, {transform_indices = @transform_3, window_bounds = array<i64: 4, 32, 128>}]} {
    %c0_i32 = arith.constant 0 : i32
    %0 = arith.cmpi eq, %arg2, %c0_i32 : i32
    %1 = arith.extui %0 : i1 to i32
    %c0_i32_0 = arith.constant 0 : i32
    %2 = arith.cmpi ne, %1, %c0_i32_0 : i32
    scf.if %2 {
      %cst_121 = arith.constant 0xFF800000 : f32
      %170 = vector.broadcast %cst_121 : f32 to vector<4x1x128xf32>
      %c0_122 = arith.constant 0 : index
      %c0_123 = arith.constant 0 : index
      %c0_124 = arith.constant 0 : index
      %171 = vector.load %arg8[%c0_122, %c0_123, %c0_124] : memref<4x1x128xf32, #tpu.memory_space<vmem>>, vector<4x1x128xf32>
      tpu.vector_store %arg8[%c0_122, %c0_123, %c0_124], %170 {strides = array<i32>} : memref<4x1x128xf32, #tpu.memory_space<vmem>>, vector<4x1x128xf32>,
      %cst_125 = arith.constant 0.000000e+00 : f32
      %172 = vector.broadcast %cst_125 : f32 to vector<4x1x128xf32>
      %c0_126 = arith.constant 0 : index
      %c0_127 = arith.constant 0 : index
      %c0_128 = arith.constant 0 : index
      %173 = vector.load %arg9[%c0_126, %c0_127, %c0_128] : memref<4x1x128xf32, #tpu.memory_space<vmem>>, vector<4x1x128xf32>
      tpu.vector_store %arg9[%c0_126, %c0_127, %c0_128], %172 {strides = array<i32>} : memref<4x1x128xf32, #tpu.memory_space<vmem>>, vector<4x1x128xf32>,
      %cst_129 = arith.constant 0.000000e+00 : f32
      %174 = vector.broadcast %cst_129 : f32 to vector<4x32x128xf32>
      %c0_130 = arith.constant 0 : index
      %c0_131 = arith.constant 0 : index
      %c0_132 = arith.constant 0 : index
      %175 = vector.load %arg10[%c0_130, %c0_131, %c0_132] : memref<4x32x128xf32, #tpu.memory_space<vmem>>, vector<4x32x128xf32>
      tpu.vector_store %arg10[%c0_130, %c0_131, %c0_132], %174 {strides = array<i32>} : memref<4x32x128xf32, #tpu.memory_space<vmem>>, vector<4x32x128xf32>,
      %c0_133 = arith.constant 0 : index
      %c0_134 = arith.constant 0 : index
      %c0_135 = arith.constant 0 : index
      %176 = vector.load %arg3[%c0_133, %c0_134, %c0_135] : memref<4x32x128xf32, #tpu.memory_space<vmem>>, vector<4x32x128xf32>
      %cst_136 = arith.constant 0.176776692 : f32
      %177 = vector.broadcast %cst_136 : f32 to vector<4x32x128xf32>
      %178 = arith.mulf %176, %177 : vector<4x32x128xf32>
      %179 = arith.truncf %178 : vector<4x32x128xf32> to vector<4x32x128xbf16>
      %c0_137 = arith.constant 0 : index
      %c0_138 = arith.constant 0 : index
      %c0_139 = arith.constant 0 : index
      %180 = vector.load %arg7[%c0_137, %c0_138, %c0_139] : memref<4x32x128xbf16, #tpu.memory_space<vmem>>, vector<4x32x128xbf16>
      tpu.vector_store %arg7[%c0_137, %c0_138, %c0_139], %179 {strides = array<i32>} : memref<4x32x128xbf16, #tpu.memory_space<vmem>>, vector<4x32x128xbf16>,
    } else {
    }
    %c0 = arith.constant 0 : index
    %c0_1 = arith.constant 0 : index
    %c0_2 = arith.constant 0 : index
    %3 = vector.load %arg7[%c0, %c0_1, %c0_2] : memref<4x32x128xbf16, #tpu.memory_space<vmem>>, vector<1x32x128xbf16>
    %4 = vector.shape_cast %3 : vector<1x32x128xbf16> to vector<32x128xbf16>
    %c0_3 = arith.constant 0 : index
    %c0_4 = arith.constant 0 : index
    %c0_5 = arith.constant 0 : index
    %5 = vector.load %arg4[%c0_3, %c0_4, %c0_5] : memref<4x32x128xf32, #tpu.memory_space<vmem>>, vector<1x32x128xf32>
    %6 = vector.shape_cast %5 : vector<1x32x128xf32> to vector<32x128xf32>
    %7 = arith.truncf %6 : vector<32x128xf32> to vector<32x128xbf16>
    %c0_6 = arith.constant 0 : index
    %c0_7 = arith.constant 0 : index
    %c0_8 = arith.constant 0 : index
    %8 = vector.load %arg5[%c0_6, %c0_7, %c0_8] : memref<4x32x128xf32, #tpu.memory_space<vmem>>, vector<1x32x128xf32>
    %9 = vector.shape_cast %8 : vector<1x32x128xf32> to vector<32x128xf32>
    %10 = arith.truncf %9 : vector<32x128xf32> to vector<32x128xbf16>
    %cst = arith.constant dense<0.000000e+00> : vector<128x128xf32>
    %11 = tpu.matmul %7, %4, %cst {dimension_numbers = #tpu.dot_dimension_numbers<[0], [0], [1], [1], [0, 1, 1, 1], [], []>} : vector<32x128xbf16>, vector<32x128xbf16>, vector<128x128xf32> -> vector<128x128xf32>
    %c0_9 = arith.constant 0 : index
    %c0_10 = arith.constant 0 : index
    %c0_11 = arith.constant 0 : index
    %12 = vector.load %arg8[%c0_9, %c0_10, %c0_11] : memref<4x1x128xf32, #tpu.memory_space<vmem>>, vector<1x1x128xf32>
    %13 = vector.shape_cast %12 : vector<1x1x128xf32> to vector<1x128xf32>
    %cst_12 = arith.constant dense<0xFF800000> : vector<128xf32>
    %14 = vector.multi_reduction <maximumf>, %11, %cst_12 [0] : vector<128x128xf32> to vector<128xf32>
    %15 = vector.shape_cast %14 : vector<128xf32> to vector<1x128xf32>
    %16 = arith.maximumf %13, %15 : vector<1x128xf32>
    %17 = arith.subf %13, %16 : vector<1x128xf32>
    %18 = math.exp %17 : vector<1x128xf32>
    %19 = vector.broadcast %16 : vector<1x128xf32> to vector<128x128xf32>
    %20 = arith.subf %11, %19 : vector<128x128xf32>
    %21 = math.exp %20 : vector<128x128xf32>
    %c0_13 = arith.constant 0 : index
    %c0_14 = arith.constant 0 : index
    %c0_15 = arith.constant 0 : index
    %22 = vector.load %arg9[%c0_13, %c0_14, %c0_15] : memref<4x1x128xf32, #tpu.memory_space<vmem>>, vector<1x1x128xf32>
    %23 = vector.shape_cast %22 : vector<1x1x128xf32> to vector<1x128xf32>
    %24 = arith.mulf %18, %23 : vector<1x128xf32>
    %cst_16 = arith.constant dense<0.000000e+00> : vector<128xf32>
    %25 = vector.multi_reduction <add>, %21, %cst_16 [0] : vector<128x128xf32> to vector<128xf32>
    %26 = vector.shape_cast %25 : vector<128xf32> to vector<1x128xf32>
    %27 = arith.addf %24, %26 : vector<1x128xf32>
    %c0_17 = arith.constant 0 : index
    %c0_18 = arith.constant 0 : index
    %c0_19 = arith.constant 0 : index
    %28 = vector.load %arg9[%c0_17, %c0_18, %c0_19] : memref<4x1x128xf32, #tpu.memory_space<vmem>>, vector<1x1x128xf32>
    %29 = vector.shape_cast %28 : vector<1x1x128xf32> to vector<1x128xf32>
    %30 = vector.shape_cast %27 : vector<1x128xf32> to vector<1x1x128xf32>
    tpu.vector_store %arg9[%c0_17, %c0_18, %c0_19], %30 {strides = array<i32>} : memref<4x1x128xf32, #tpu.memory_space<vmem>>, vector<1x1x128xf32>,
    %c0_20 = arith.constant 0 : index
    %c0_21 = arith.constant 0 : index
    %c0_22 = arith.constant 0 : index
    %31 = vector.load %arg8[%c0_20, %c0_21, %c0_22] : memref<4x1x128xf32, #tpu.memory_space<vmem>>, vector<1x1x128xf32>
    %32 = vector.shape_cast %31 : vector<1x1x128xf32> to vector<1x128xf32>
    %33 = vector.shape_cast %16 : vector<1x128xf32> to vector<1x1x128xf32>
    tpu.vector_store %arg8[%c0_20, %c0_21, %c0_22], %33 {strides = array<i32>} : memref<4x1x128xf32, #tpu.memory_space<vmem>>, vector<1x1x128xf32>,
    %34 = arith.truncf %21 : vector<128x128xf32> to vector<128x128xbf16>
    %cst_23 = arith.constant dense<0.000000e+00> : vector<32x128xf32>
    %35 = tpu.matmul %10, %34, %cst_23 {dimension_numbers = #tpu.dot_dimension_numbers<[1], [0], [0], [1], [0, 0, 1, 1], [], []>} : vector<32x128xbf16>, vector<128x128xbf16>, vector<32x128xf32> -> vector<32x128xf32>
    %c0_24 = arith.constant 0 : index
    %c0_25 = arith.constant 0 : index
    %c0_26 = arith.constant 0 : index
    %36 = vector.load %arg10[%c0_24, %c0_25, %c0_26] : memref<4x32x128xf32, #tpu.memory_space<vmem>>, vector<1x32x128xf32>
    %37 = vector.shape_cast %36 : vector<1x32x128xf32> to vector<32x128xf32>
    %38 = vector.broadcast %18 : vector<1x128xf32> to vector<32x128xf32>
    %39 = arith.mulf %37, %38 : vector<32x128xf32>
    %40 = arith.addf %39, %35 : vector<32x128xf32>
    %c0_27 = arith.constant 0 : index
    %c0_28 = arith.constant 0 : index
    %c0_29 = arith.constant 0 : index
    %41 = vector.load %arg10[%c0_27, %c0_28, %c0_29] : memref<4x32x128xf32, #tpu.memory_space<vmem>>, vector<1x32x128xf32>
    %42 = vector.shape_cast %41 : vector<1x32x128xf32> to vector<32x128xf32>
    %43 = vector.shape_cast %40 : vector<32x128xf32> to vector<1x32x128xf32>
    tpu.vector_store %arg10[%c0_27, %c0_28, %c0_29], %43 {strides = array<i32>} : memref<4x32x128xf32, #tpu.memory_space<vmem>>, vector<1x32x128xf32>,
    %c1 = arith.constant 1 : index
    %c0_30 = arith.constant 0 : index
    %c0_31 = arith.constant 0 : index
    %44 = vector.load %arg7[%c1, %c0_30, %c0_31] : memref<4x32x128xbf16, #tpu.memory_space<vmem>>, vector<1x32x128xbf16>
    %45 = vector.shape_cast %44 : vector<1x32x128xbf16> to vector<32x128xbf16>
    %c1_32 = arith.constant 1 : index
    %c0_33 = arith.constant 0 : index
    %c0_34 = arith.constant 0 : index
    %46 = vector.load %arg4[%c1_32, %c0_33, %c0_34] : memref<4x32x128xf32, #tpu.memory_space<vmem>>, vector<1x32x128xf32>
    %47 = vector.shape_cast %46 : vector<1x32x128xf32> to vector<32x128xf32>
    %48 = arith.truncf %47 : vector<32x128xf32> to vector<32x128xbf16>
    %c1_35 = arith.constant 1 : index
    %c0_36 = arith.constant 0 : index
    %c0_37 = arith.constant 0 : index
    %49 = vector.load %arg5[%c1_35, %c0_36, %c0_37] : memref<4x32x128xf32, #tpu.memory_space<vmem>>, vector<1x32x128xf32>
    %50 = vector.shape_cast %49 : vector<1x32x128xf32> to vector<32x128xf32>
    %51 = arith.truncf %50 : vector<32x128xf32> to vector<32x128xbf16>
    %cst_38 = arith.constant dense<0.000000e+00> : vector<128x128xf32>
    %52 = tpu.matmul %48, %45, %cst_38 {dimension_numbers = #tpu.dot_dimension_numbers<[0], [0], [1], [1], [0, 1, 1, 1], [], []>} : vector<32x128xbf16>, vector<32x128xbf16>, vector<128x128xf32> -> vector<128x128xf32>
    %c1_39 = arith.constant 1 : index
    %c0_40 = arith.constant 0 : index
    %c0_41 = arith.constant 0 : index
    %53 = vector.load %arg8[%c1_39, %c0_40, %c0_41] : memref<4x1x128xf32, #tpu.memory_space<vmem>>, vector<1x1x128xf32>
    %54 = vector.shape_cast %53 : vector<1x1x128xf32> to vector<1x128xf32>
    %cst_42 = arith.constant dense<0xFF800000> : vector<128xf32>
    %55 = vector.multi_reduction <maximumf>, %52, %cst_42 [0] : vector<128x128xf32> to vector<128xf32>
    %56 = vector.shape_cast %55 : vector<128xf32> to vector<1x128xf32>
    %57 = arith.maximumf %54, %56 : vector<1x128xf32>
    %58 = arith.subf %54, %57 : vector<1x128xf32>
    %59 = math.exp %58 : vector<1x128xf32>
    %60 = vector.broadcast %57 : vector<1x128xf32> to vector<128x128xf32>
    %61 = arith.subf %52, %60 : vector<128x128xf32>
    %62 = math.exp %61 : vector<128x128xf32>
    %c1_43 = arith.constant 1 : index
    %c0_44 = arith.constant 0 : index
    %c0_45 = arith.constant 0 : index
    %63 = vector.load %arg9[%c1_43, %c0_44, %c0_45] : memref<4x1x128xf32, #tpu.memory_space<vmem>>, vector<1x1x128xf32>
    %64 = vector.shape_cast %63 : vector<1x1x128xf32> to vector<1x128xf32>
    %65 = arith.mulf %59, %64 : vector<1x128xf32>
    %cst_46 = arith.constant dense<0.000000e+00> : vector<128xf32>
    %66 = vector.multi_reduction <add>, %62, %cst_46 [0] : vector<128x128xf32> to vector<128xf32>
    %67 = vector.shape_cast %66 : vector<128xf32> to vector<1x128xf32>
    %68 = arith.addf %65, %67 : vector<1x128xf32>
    %c1_47 = arith.constant 1 : index
    %c0_48 = arith.constant 0 : index
    %c0_49 = arith.constant 0 : index
    %69 = vector.load %arg9[%c1_47, %c0_48, %c0_49] : memref<4x1x128xf32, #tpu.memory_space<vmem>>, vector<1x1x128xf32>
    %70 = vector.shape_cast %69 : vector<1x1x128xf32> to vector<1x128xf32>
    %71 = vector.shape_cast %68 : vector<1x128xf32> to vector<1x1x128xf32>
    tpu.vector_store %arg9[%c1_47, %c0_48, %c0_49], %71 {strides = array<i32>} : memref<4x1x128xf32, #tpu.memory_space<vmem>>, vector<1x1x128xf32>,
    %c1_50 = arith.constant 1 : index
    %c0_51 = arith.constant 0 : index
    %c0_52 = arith.constant 0 : index
    %72 = vector.load %arg8[%c1_50, %c0_51, %c0_52] : memref<4x1x128xf32, #tpu.memory_space<vmem>>, vector<1x1x128xf32>
    %73 = vector.shape_cast %72 : vector<1x1x128xf32> to vector<1x128xf32>
    %74 = vector.shape_cast %57 : vector<1x128xf32> to vector<1x1x128xf32>
    tpu.vector_store %arg8[%c1_50, %c0_51, %c0_52], %74 {strides = array<i32>} : memref<4x1x128xf32, #tpu.memory_space<vmem>>, vector<1x1x128xf32>,
    %75 = arith.truncf %62 : vector<128x128xf32> to vector<128x128xbf16>
    %cst_53 = arith.constant dense<0.000000e+00> : vector<32x128xf32>
    %76 = tpu.matmul %51, %75, %cst_53 {dimension_numbers = #tpu.dot_dimension_numbers<[1], [0], [0], [1], [0, 0, 1, 1], [], []>} : vector<32x128xbf16>, vector<128x128xbf16>, vector<32x128xf32> -> vector<32x128xf32>
    %c1_54 = arith.constant 1 : index
    %c0_55 = arith.constant 0 : index
    %c0_56 = arith.constant 0 : index
    %77 = vector.load %arg10[%c1_54, %c0_55, %c0_56] : memref<4x32x128xf32, #tpu.memory_space<vmem>>, vector<1x32x128xf32>
    %78 = vector.shape_cast %77 : vector<1x32x128xf32> to vector<32x128xf32>
    %79 = vector.broadcast %59 : vector<1x128xf32> to vector<32x128xf32>
    %80 = arith.mulf %78, %79 : vector<32x128xf32>
    %81 = arith.addf %80, %76 : vector<32x128xf32>
    %c1_57 = arith.constant 1 : index
    %c0_58 = arith.constant 0 : index
    %c0_59 = arith.constant 0 : index
    %82 = vector.load %arg10[%c1_57, %c0_58, %c0_59] : memref<4x32x128xf32, #tpu.memory_space<vmem>>, vector<1x32x128xf32>
    %83 = vector.shape_cast %82 : vector<1x32x128xf32> to vector<32x128xf32>
    %84 = vector.shape_cast %81 : vector<32x128xf32> to vector<1x32x128xf32>
    tpu.vector_store %arg10[%c1_57, %c0_58, %c0_59], %84 {strides = array<i32>} : memref<4x32x128xf32, #tpu.memory_space<vmem>>, vector<1x32x128xf32>,
    %c2 = arith.constant 2 : index
    %c0_60 = arith.constant 0 : index
    %c0_61 = arith.constant 0 : index
    %85 = vector.load %arg7[%c2, %c0_60, %c0_61] : memref<4x32x128xbf16, #tpu.memory_space<vmem>>, vector<1x32x128xbf16>
    %86 = vector.shape_cast %85 : vector<1x32x128xbf16> to vector<32x128xbf16>
    %c2_62 = arith.constant 2 : index
    %c0_63 = arith.constant 0 : index
    %c0_64 = arith.constant 0 : index
    %87 = vector.load %arg4[%c2_62, %c0_63, %c0_64] : memref<4x32x128xf32, #tpu.memory_space<vmem>>, vector<1x32x128xf32>
    %88 = vector.shape_cast %87 : vector<1x32x128xf32> to vector<32x128xf32>
    %89 = arith.truncf %88 : vector<32x128xf32> to vector<32x128xbf16>
    %c2_65 = arith.constant 2 : index
    %c0_66 = arith.constant 0 : index
    %c0_67 = arith.constant 0 : index
    %90 = vector.load %arg5[%c2_65, %c0_66, %c0_67] : memref<4x32x128xf32, #tpu.memory_space<vmem>>, vector<1x32x128xf32>
    %91 = vector.shape_cast %90 : vector<1x32x128xf32> to vector<32x128xf32>
    %92 = arith.truncf %91 : vector<32x128xf32> to vector<32x128xbf16>
    %cst_68 = arith.constant dense<0.000000e+00> : vector<128x128xf32>
    %93 = tpu.matmul %89, %86, %cst_68 {dimension_numbers = #tpu.dot_dimension_numbers<[0], [0], [1], [1], [0, 1, 1, 1], [], []>} : vector<32x128xbf16>, vector<32x128xbf16>, vector<128x128xf32> -> vector<128x128xf32>
    %c2_69 = arith.constant 2 : index
    %c0_70 = arith.constant 0 : index
    %c0_71 = arith.constant 0 : index
    %94 = vector.load %arg8[%c2_69, %c0_70, %c0_71] : memref<4x1x128xf32, #tpu.memory_space<vmem>>, vector<1x1x128xf32>
    %95 = vector.shape_cast %94 : vector<1x1x128xf32> to vector<1x128xf32>
    %cst_72 = arith.constant dense<0xFF800000> : vector<128xf32>
    %96 = vector.multi_reduction <maximumf>, %93, %cst_72 [0] : vector<128x128xf32> to vector<128xf32>
    %97 = vector.shape_cast %96 : vector<128xf32> to vector<1x128xf32>
    %98 = arith.maximumf %95, %97 : vector<1x128xf32>
    %99 = arith.subf %95, %98 : vector<1x128xf32>
    %100 = math.exp %99 : vector<1x128xf32>
    %101 = vector.broadcast %98 : vector<1x128xf32> to vector<128x128xf32>
    %102 = arith.subf %93, %101 : vector<128x128xf32>
    %103 = math.exp %102 : vector<128x128xf32>
    %c2_73 = arith.constant 2 : index
    %c0_74 = arith.constant 0 : index
    %c0_75 = arith.constant 0 : index
    %104 = vector.load %arg9[%c2_73, %c0_74, %c0_75] : memref<4x1x128xf32, #tpu.memory_space<vmem>>, vector<1x1x128xf32>
    %105 = vector.shape_cast %104 : vector<1x1x128xf32> to vector<1x128xf32>
    %106 = arith.mulf %100, %105 : vector<1x128xf32>
    %cst_76 = arith.constant dense<0.000000e+00> : vector<128xf32>
    %107 = vector.multi_reduction <add>, %103, %cst_76 [0] : vector<128x128xf32> to vector<128xf32>
    %108 = vector.shape_cast %107 : vector<128xf32> to vector<1x128xf32>
    %109 = arith.addf %106, %108 : vector<1x128xf32>
    %c2_77 = arith.constant 2 : index
    %c0_78 = arith.constant 0 : index
    %c0_79 = arith.constant 0 : index
    %110 = vector.load %arg9[%c2_77, %c0_78, %c0_79] : memref<4x1x128xf32, #tpu.memory_space<vmem>>, vector<1x1x128xf32>
    %111 = vector.shape_cast %110 : vector<1x1x128xf32> to vector<1x128xf32>
    %112 = vector.shape_cast %109 : vector<1x128xf32> to vector<1x1x128xf32>
    tpu.vector_store %arg9[%c2_77, %c0_78, %c0_79], %112 {strides = array<i32>} : memref<4x1x128xf32, #tpu.memory_space<vmem>>, vector<1x1x128xf32>,
    %c2_80 = arith.constant 2 : index
    %c0_81 = arith.constant 0 : index
    %c0_82 = arith.constant 0 : index
    %113 = vector.load %arg8[%c2_80, %c0_81, %c0_82] : memref<4x1x128xf32, #tpu.memory_space<vmem>>, vector<1x1x128xf32>
    %114 = vector.shape_cast %113 : vector<1x1x128xf32> to vector<1x128xf32>
    %115 = vector.shape_cast %98 : vector<1x128xf32> to vector<1x1x128xf32>
    tpu.vector_store %arg8[%c2_80, %c0_81, %c0_82], %115 {strides = array<i32>} : memref<4x1x128xf32, #tpu.memory_space<vmem>>, vector<1x1x128xf32>,
    %116 = arith.truncf %103 : vector<128x128xf32> to vector<128x128xbf16>
    %cst_83 = arith.constant dense<0.000000e+00> : vector<32x128xf32>
    %117 = tpu.matmul %92, %116, %cst_83 {dimension_numbers = #tpu.dot_dimension_numbers<[1], [0], [0], [1], [0, 0, 1, 1], [], []>} : vector<32x128xbf16>, vector<128x128xbf16>, vector<32x128xf32> -> vector<32x128xf32>
    %c2_84 = arith.constant 2 : index
    %c0_85 = arith.constant 0 : index
    %c0_86 = arith.constant 0 : index
    %118 = vector.load %arg10[%c2_84, %c0_85, %c0_86] : memref<4x32x128xf32, #tpu.memory_space<vmem>>, vector<1x32x128xf32>
    %119 = vector.shape_cast %118 : vector<1x32x128xf32> to vector<32x128xf32>
    %120 = vector.broadcast %100 : vector<1x128xf32> to vector<32x128xf32>
    %121 = arith.mulf %119, %120 : vector<32x128xf32>
    %122 = arith.addf %121, %117 : vector<32x128xf32>
    %c2_87 = arith.constant 2 : index
    %c0_88 = arith.constant 0 : index
    %c0_89 = arith.constant 0 : index
    %123 = vector.load %arg10[%c2_87, %c0_88, %c0_89] : memref<4x32x128xf32, #tpu.memory_space<vmem>>, vector<1x32x128xf32>
    %124 = vector.shape_cast %123 : vector<1x32x128xf32> to vector<32x128xf32>
    %125 = vector.shape_cast %122 : vector<32x128xf32> to vector<1x32x128xf32>
    tpu.vector_store %arg10[%c2_87, %c0_88, %c0_89], %125 {strides = array<i32>} : memref<4x32x128xf32, #tpu.memory_space<vmem>>, vector<1x32x128xf32>,
    %c3 = arith.constant 3 : index
    %c0_90 = arith.constant 0 : index
    %c0_91 = arith.constant 0 : index
    %126 = vector.load %arg7[%c3, %c0_90, %c0_91] : memref<4x32x128xbf16, #tpu.memory_space<vmem>>, vector<1x32x128xbf16>
    %127 = vector.shape_cast %126 : vector<1x32x128xbf16> to vector<32x128xbf16>
    %c3_92 = arith.constant 3 : index
    %c0_93 = arith.constant 0 : index
    %c0_94 = arith.constant 0 : index
    %128 = vector.load %arg4[%c3_92, %c0_93, %c0_94] : memref<4x32x128xf32, #tpu.memory_space<vmem>>, vector<1x32x128xf32>
    %129 = vector.shape_cast %128 : vector<1x32x128xf32> to vector<32x128xf32>
    %130 = arith.truncf %129 : vector<32x128xf32> to vector<32x128xbf16>
    %c3_95 = arith.constant 3 : index
    %c0_96 = arith.constant 0 : index
    %c0_97 = arith.constant 0 : index
    %131 = vector.load %arg5[%c3_95, %c0_96, %c0_97] : memref<4x32x128xf32, #tpu.memory_space<vmem>>, vector<1x32x128xf32>
    %132 = vector.shape_cast %131 : vector<1x32x128xf32> to vector<32x128xf32>
    %133 = arith.truncf %132 : vector<32x128xf32> to vector<32x128xbf16>
    %cst_98 = arith.constant dense<0.000000e+00> : vector<128x128xf32>
    %134 = tpu.matmul %130, %127, %cst_98 {dimension_numbers = #tpu.dot_dimension_numbers<[0], [0], [1], [1], [0, 1, 1, 1], [], []>} : vector<32x128xbf16>, vector<32x128xbf16>, vector<128x128xf32> -> vector<128x128xf32>
    %c3_99 = arith.constant 3 : index
    %c0_100 = arith.constant 0 : index
    %c0_101 = arith.constant 0 : index
    %135 = vector.load %arg8[%c3_99, %c0_100, %c0_101] : memref<4x1x128xf32, #tpu.memory_space<vmem>>, vector<1x1x128xf32>
    %136 = vector.shape_cast %135 : vector<1x1x128xf32> to vector<1x128xf32>
    %cst_102 = arith.constant dense<0xFF800000> : vector<128xf32>
    %137 = vector.multi_reduction <maximumf>, %134, %cst_102 [0] : vector<128x128xf32> to vector<128xf32>
    %138 = vector.shape_cast %137 : vector<128xf32> to vector<1x128xf32>
    %139 = arith.maximumf %136, %138 : vector<1x128xf32>
    %140 = arith.subf %136, %139 : vector<1x128xf32>
    %141 = math.exp %140 : vector<1x128xf32>
    %142 = vector.broadcast %139 : vector<1x128xf32> to vector<128x128xf32>
    %143 = arith.subf %134, %142 : vector<128x128xf32>
    %144 = math.exp %143 : vector<128x128xf32>
    %c3_103 = arith.constant 3 : index
    %c0_104 = arith.constant 0 : index
    %c0_105 = arith.constant 0 : index
    %145 = vector.load %arg9[%c3_103, %c0_104, %c0_105] : memref<4x1x128xf32, #tpu.memory_space<vmem>>, vector<1x1x128xf32>
    %146 = vector.shape_cast %145 : vector<1x1x128xf32> to vector<1x128xf32>
    %147 = arith.mulf %141, %146 : vector<1x128xf32>
    %cst_106 = arith.constant dense<0.000000e+00> : vector<128xf32>
    %148 = vector.multi_reduction <add>, %144, %cst_106 [0] : vector<128x128xf32> to vector<128xf32>
    %149 = vector.shape_cast %148 : vector<128xf32> to vector<1x128xf32>
    %150 = arith.addf %147, %149 : vector<1x128xf32>
    %c3_107 = arith.constant 3 : index
    %c0_108 = arith.constant 0 : index
    %c0_109 = arith.constant 0 : index
    %151 = vector.load %arg9[%c3_107, %c0_108, %c0_109] : memref<4x1x128xf32, #tpu.memory_space<vmem>>, vector<1x1x128xf32>
    %152 = vector.shape_cast %151 : vector<1x1x128xf32> to vector<1x128xf32>
    %153 = vector.shape_cast %150 : vector<1x128xf32> to vector<1x1x128xf32>
    tpu.vector_store %arg9[%c3_107, %c0_108, %c0_109], %153 {strides = array<i32>} : memref<4x1x128xf32, #tpu.memory_space<vmem>>, vector<1x1x128xf32>,
    %c3_110 = arith.constant 3 : index
    %c0_111 = arith.constant 0 : index
    %c0_112 = arith.constant 0 : index
    %154 = vector.load %arg8[%c3_110, %c0_111, %c0_112] : memref<4x1x128xf32, #tpu.memory_space<vmem>>, vector<1x1x128xf32>
    %155 = vector.shape_cast %154 : vector<1x1x128xf32> to vector<1x128xf32>
    %156 = vector.shape_cast %139 : vector<1x128xf32> to vector<1x1x128xf32>
    tpu.vector_store %arg8[%c3_110, %c0_111, %c0_112], %156 {strides = array<i32>} : memref<4x1x128xf32, #tpu.memory_space<vmem>>, vector<1x1x128xf32>,
    %157 = arith.truncf %144 : vector<128x128xf32> to vector<128x128xbf16>
    %cst_113 = arith.constant dense<0.000000e+00> : vector<32x128xf32>
    %158 = tpu.matmul %133, %157, %cst_113 {dimension_numbers = #tpu.dot_dimension_numbers<[1], [0], [0], [1], [0, 0, 1, 1], [], []>} : vector<32x128xbf16>, vector<128x128xbf16>, vector<32x128xf32> -> vector<32x128xf32>
    %c3_114 = arith.constant 3 : index
    %c0_115 = arith.constant 0 : index
    %c0_116 = arith.constant 0 : index
    %159 = vector.load %arg10[%c3_114, %c0_115, %c0_116] : memref<4x32x128xf32, #tpu.memory_space<vmem>>, vector<1x32x128xf32>
    %160 = vector.shape_cast %159 : vector<1x32x128xf32> to vector<32x128xf32>
    %161 = vector.broadcast %141 : vector<1x128xf32> to vector<32x128xf32>
    %162 = arith.mulf %160, %161 : vector<32x128xf32>
    %163 = arith.addf %162, %158 : vector<32x128xf32>
    %c3_117 = arith.constant 3 : index
    %c0_118 = arith.constant 0 : index
    %c0_119 = arith.constant 0 : index
    %164 = vector.load %arg10[%c3_117, %c0_118, %c0_119] : memref<4x32x128xf32, #tpu.memory_space<vmem>>, vector<1x32x128xf32>
    %165 = vector.shape_cast %164 : vector<1x32x128xf32> to vector<32x128xf32>
    %166 = vector.shape_cast %163 : vector<32x128xf32> to vector<1x32x128xf32>
    tpu.vector_store %arg10[%c3_117, %c0_118, %c0_119], %166 {strides = array<i32>} : memref<4x32x128xf32, #tpu.memory_space<vmem>>, vector<1x32x128xf32>,
    %c1_i32 = arith.constant 1 : i32
    %167 = arith.cmpi eq, %arg2, %c1_i32 : i32
    %168 = arith.extui %167 : i1 to i32
    %c0_i32_120 = arith.constant 0 : i32
    %169 = arith.cmpi ne, %168, %c0_i32_120 : i32
    scf.if %169 {
      %c0_121 = arith.constant 0 : index
      %c0_122 = arith.constant 0 : index
      %c0_123 = arith.constant 0 : index
      %170 = vector.load %arg10[%c0_121, %c0_122, %c0_123] : memref<4x32x128xf32, #tpu.memory_space<vmem>>, vector<4x32x128xf32>
      %c0_124 = arith.constant 0 : index
      %c0_125 = arith.constant 0 : index
      %c0_126 = arith.constant 0 : index
      %171 = vector.load %arg9[%c0_124, %c0_125, %c0_126] : memref<4x1x128xf32, #tpu.memory_space<vmem>>, vector<4x1x128xf32>
      %172 = vector.broadcast %171 : vector<4x1x128xf32> to vector<4x32x128xf32>
      %173 = arith.divf %170, %172 : vector<4x32x128xf32>
      %c0_127 = arith.constant 0 : index
      %c0_128 = arith.constant 0 : index
      %c0_129 = arith.constant 0 : index
      %174 = vector.load %arg6[%c0_127, %c0_128, %c0_129] : memref<4x32x128xf32, #tpu.memory_space<vmem>>, vector<4x32x128xf32>
      tpu.vector_store %arg6[%c0_127, %c0_128, %c0_129], %173 {strides = array<i32>} : memref<4x32x128xf32, #tpu.memory_space<vmem>>, vector<4x32x128xf32>,
    } else {
    }
    return
  }
  func.func @transform_0(%arg0: i32, %arg1: i32, %arg2: i32) -> (i32, i32, i32) {
    %c0_i32 = arith.constant 0 : i32
    %c0_i32_0 = arith.constant 0 : i32
    return %arg0, %c0_i32, %arg1 : i32, i32, i32
  }
  func.func @transform_1(%arg0: i32, %arg1: i32, %arg2: i32) -> (i32, i32, i32) {
    %c1_i32 = arith.constant 1 : i32
    %c0_i32 = arith.constant 0 : i32
    return %arg0, %c1_i32, %arg2 : i32, i32, i32
  }
  func.func @transform_2(%arg0: i32, %arg1: i32, %arg2: i32) -> (i32, i32, i32) {
    %c2_i32 = arith.constant 2 : i32
    %c0_i32 = arith.constant 0 : i32
    return %arg0, %c2_i32, %arg2 : i32, i32, i32
  }
  func.func @transform_3(%arg0: i32, %arg1: i32, %arg2: i32) -> (i32, i32, i32) {
    %c0_i32 = arith.constant 0 : i32
    %c0_i32_0 = arith.constant 0 : i32
    return %arg0, %c0_i32, %arg1 : i32, i32, i32
  }
}

</mosaic_0001>

<llo_original>
// kernel: tpu_custom_call.1
$region0: #{tpu_custom_call.1}
  #allocation0 [shape = 'u32[]', space=smem, size = 0x4, offset = 0x4, fixed_abs, tag = 'smem constant byte address 0x4 - core index']
  #allocation1 [shape = 'u32[144,128]{1,0:T(1,128)}', space=vmem, size = 0x12000, scoped, tag = 'internal scratch']
  #allocation2 [shape = 'bf16[4,32,128]{2,1,0:T(16,128)(2,1)}', space=vmem, size = 0x8000, scoped, tag = 'scratch operand']
  #allocation3 [shape = 'f32[4,1,128]{2,1,0:T(1,128)}', space=vmem, size = 0x800, scoped, tag = 'scratch operand']
  #allocation4 [shape = 'f32[4,1,128]{2,1,0:T(1,128)}', space=vmem, size = 0x800, scoped, tag = 'scratch operand']
  #allocation5 [shape = 'f32[4,32,128]{2,1,0:T(8,128)}', space=vmem, size = 0x10000, scoped, tag = 'scratch operand']
  #allocation13 [shape = 's32[]', space=sflag, size = 0x4, offset = 0, fixed_abs, tag = 'sflag constant byte address 0x0 - dummy sync flag']
  #allocation15 [shape = 's32[]', space=sflag, size = 0x4, offset = 0, fixed_abs, tag = 'sflag constant byte address 0x0 - dummy sync flag']
  #allocation17 [shape = 's32[]', space=sflag, size = 0x4, offset = 0, fixed_abs, tag = 'sflag constant byte address 0x0 - dummy sync flag']
  %s0 = inlined_call_operand.hbm [shape: f32[4,96,256], index: 0, kind: input, shape index: {}]
  %s1 = inlined_call_operand.hbm [shape: f32[4,96,256], index: 1, kind: input, shape index: {}]
  %s2 = inlined_call_operand.hbm [shape: f32[4,96,256], index: 2, kind: input, shape index: {}]
  %s3 = inlined_call_operand.hbm [shape: f32[4,32,256], index: 3, kind: output, shape index: {}]
  %s4 = sld [smem:[#allocation0]]
  $region65: #{tpu_custom_call.1} parent=0
    _
  %s6 = ssub.s32 1, %s4
  %s7 = scalar_select 0, %s6, %s4
  $region1: #{tpu_custom_call.1} parent=0
    #allocation6 [shape = 'u8[131072]{0}', space=vmem, size = 0x20000, scoped, tag = 'input window, operand 0']
    #allocation7 [shape = 's32[2]{0}', space=sflag, size = 0x8, scoped, tag = 'scoped memory for tpu_custom_call.1']
    #allocation8 [shape = 's32[2]{0}', space=sflag, size = 0x8, scoped, tag = 'scoped memory for tpu_custom_call.1']
    #allocation9 [shape = 'u8[131072]{0}', space=vmem, size = 0x20000, scoped, tag = 'input window, operand 1']
    #allocation10 [shape = 's32[2]{0}', space=sflag, size = 0x8, scoped, tag = 'scoped memory for tpu_custom_call.1']
    #allocation11 [shape = 'u8[131072]{0}', space=vmem, size = 0x20000, scoped, tag = 'input window, operand 2']
    #allocation12 [shape = 'u8[131072]{0}', space=vmem, size = 0x20000, scoped, tag = 'output window, operand 0']
    %8 = vsyncpa [#allocation7], 0
    %s9 = scalar_lea.sflag [#allocation7], 1
    %10 = vsyncpa %s9, 0
    %11 = vsyncpa [#allocation10], 0
    %s12 = scalar_lea.sflag [#allocation10], 1
    %13 = vsyncpa %s12, 0
    %14 = vsyncpa [#allocation8], 0
    %s15 = scalar_lea.sflag [#allocation8], 1
    %16 = vsyncpa %s15, 0
    loop: start=0, step=1, limit=6
    $region2: #{tpu_custom_call.1} parent=1 // loop_pre_header
      _
    $region3: #{tpu_custom_call.1} parent=1 // loop_header
      %s18 = sphi 0, %s22
      %p19 = scmp.ge.s32.totalorder %s18, 6
      %s25 = sphi 0, %s44
      %s26 = sphi 0, %s40
      %s27 = sphi 0, %s36
      %s28 = sphi 0, %s25
      %s29 = sphi 0, %s26
      %s30 = sphi 0, %s27
      %s31 = sphi 0, %s28
      %s32 = sphi 0, %s29
      %s33 = sphi 0, %s30
      %s49 = sphi 0, %s51
      %s52 = sphi 0, %s49
      %s53 = sphi 0, %s52
      %s69 = sphi 0, %s53
      %s77 = sphi 0, %s79
      %s80 = sphi 0, %s77
      %s81 = sphi 0, %s80
      %s97 = sphi 0, %s81
      %s105 = sphi 0, %s107
      %s108 = sphi 0, %s105
      %s109 = sphi 0, %s108
      %s125 = sphi 0, %s109
      %s133 = sphi 0, %s135
      %s136 = sphi 0, %s133
      %s137 = sphi 0, %s136
      %s153 = sphi 0, %s137
    $region4: #{tpu_custom_call.1} parent=1 // loop_header_branch
      %21 = sbr.rel (%p19) target = $region8
    $region5: #{tpu_custom_call.1} parent=1 // loop_body
      %s23 = ssub.s32 %s18, 1
      %s24 = ssub.s32 %s18, 2
      %s34 = sadd.s32 1, %s27
      %p35 = scmp.ge.s32.totalorder %s34, 2
      %s36 = scalar_select %p35, 0, %s34
      %s37 = sadd.s32 1, %s26
      %s38 = scalar_select %p35, %s37, %s26
      %p39 = scmp.ge.s32.totalorder %s38, 2
      %s40 = scalar_select %p39, 0, %s38
      %s41 = sadd.s32 1, %s25
      %s42 = scalar_select %p39, %s41, %s25
      %p43 = scmp.ge.s32.totalorder %s42, 1
      %s44 = scalar_select %p43, 0, %s42
      %s45 = ssub.s32 %s25, %s44
      %s46 = ssub.s32 %s26, %s40
      %s47 = sor.u32 %s45, %s46
      %p48 = scmp.eq.s32.totalorder %s47, 0
      %s50 = sadd.s32 %s49, 1
      %s51 = scalar_select %p48, %s49, %s50
      %p54 = pneg %p48
      %p55 = scmp.eq.s32.totalorder %s18, 3
      %p56 = por %p54, %p55
      %p57 = scmp.ne.s32.totalorder %s49, %s52
      %p58 = scmp.eq.s32.totalorder %s18, 0
      %p59 = por %p57, %p58
      %p60 = scmp.ne.s32.totalorder %s49, %s52
      %p61 = scmp.eq.s32.totalorder %s23, 3
      %p62 = por %p60, %p61
      %p63 = scmp.ne.s32.totalorder %s52, %s53
      %p64 = scmp.eq.s32.totalorder %s23, 0
      %p65 = por %p63, %p64
      %p66 = scmp.ne.s32.totalorder %s52, %s53
      %p67 = scmp.eq.s32.totalorder %s24, 3
      %p68 = por %p66, %p67
      %p70 = scmp.ne.s32.totalorder %s53, %s69
      %p71 = scmp.eq.s32.totalorder %s24, 0
      %p72 = por %p70, %p71
      %s73 = ssub.s32 %s25, %s44
      %s74 = ssub.s32 %s27, %s36
      %s75 = sor.u32 %s73, %s74
      %p76 = scmp.eq.s32.totalorder %s75, 0
      %s78 = sadd.s32 %s77, 1
      %s79 = scalar_select %p76, %s77, %s78
      %p82 = pneg %p76
      %p83 = scmp.eq.s32.totalorder %s18, 3
      %p84 = por %p82, %p83
      %p85 = scmp.ne.s32.totalorder %s77, %s80
      %p86 = scmp.eq.s32.totalorder %s18, 0
      %p87 = por %p85, %p86
      %p88 = scmp.ne.s32.totalorder %s77, %s80
      %p89 = scmp.eq.s32.totalorder %s23, 3
      %p90 = por %p88, %p89
      %p91 = scmp.ne.s32.totalorder %s80, %s81
      %p92 = scmp.eq.s32.totalorder %s23, 0
      %p93 = por %p91, %p92
      %p94 = scmp.ne.s32.totalorder %s80, %s81
      %p95 = scmp.eq.s32.totalorder %s24, 3
      %p96 = por %p94, %p95
      %p98 = scmp.ne.s32.totalorder %s81, %s97
      %p99 = scmp.eq.s32.totalorder %s24, 0
      %p100 = por %p98, %p99
      %s101 = ssub.s32 %s25, %s44
      %s102 = ssub.s32 %s27, %s36
      %s103 = sor.u32 %s101, %s102
      %p104 = scmp.eq.s32.totalorder %s103, 0
      %s106 = sadd.s32 %s105, 1
      %s107 = scalar_select %p104, %s105, %s106
      %p110 = pneg %p104
      %p111 = scmp.eq.s32.totalorder %s18, 3
      %p112 = por %p110, %p111
      %p113 = scmp.ne.s32.totalorder %s105, %s108
      %p114 = scmp.eq.s32.totalorder %s18, 0
      %p115 = por %p113, %p114
      %p116 = scmp.ne.s32.totalorder %s105, %s108
      %p117 = scmp.eq.s32.totalorder %s23, 3
      %p118 = por %p116, %p117
      %p119 = scmp.ne.s32.totalorder %s108, %s109
      %p120 = scmp.eq.s32.totalorder %s23, 0
      %p121 = por %p119, %p120
      %p122 = scmp.ne.s32.totalorder %s108, %s109
      %p123 = scmp.eq.s32.totalorder %s24, 3
      %p124 = por %p122, %p123
      %p126 = scmp.ne.s32.totalorder %s109, %s125
      %p127 = scmp.eq.s32.totalorder %s24, 0
      %p128 = por %p126, %p127
      %s129 = ssub.s32 %s25, %s44
      %s130 = ssub.s32 %s26, %s40
      %s131 = sor.u32 %s129, %s130
      %p132 = scmp.eq.s32.totalorder %s131, 0
      %s134 = sadd.s32 %s133, 1
      %s135 = scalar_select %p132, %s133, %s134
      %p138 = pneg %p132
      %p139 = scmp.eq.s32.totalorder %s18, 3
      %p140 = por %p138, %p139
      %p141 = scmp.ne.s32.totalorder %s133, %s136
      %p142 = scmp.eq.s32.totalorder %s18, 0
      %p143 = por %p141, %p142
      %p144 = scmp.ne.s32.totalorder %s133, %s136
      %p145 = scmp.eq.s32.totalorder %s23, 3
      %p146 = por %p144, %p145
      %p147 = scmp.ne.s32.totalorder %s136, %s137
      %p148 = scmp.eq.s32.totalorder %s23, 0
      %p149 = por %p147, %p148
      %p150 = scmp.ne.s32.totalorder %s136, %s137
      %p151 = scmp.eq.s32.totalorder %s24, 3
      %p152 = por %p150, %p151
      %p154 = scmp.ne.s32.totalorder %s137, %s153
      %p155 = scmp.eq.s32.totalorder %s24, 0
      %p156 = por %p154, %p155
      %p157 = scmp.le.s32.totalorder 1, %s18
      %p158 = scmp.lt.s32.totalorder %s18, 5
      %p159 = pnand %p157, %p158
      %p160 = pneg %p159
      // Predicated region
      $region9: #{tpu_custom_call.1} parent=5 // pred_check
        _
      $region10: #{tpu_custom_call.1} parent=5 // pred_check_branch
        %162 = sbr.rel (%p159) target = $region12
      $region11: #{tpu_custom_call.1} parent=5 // pred_region
        %s163 = ssub.s32 %s18, 1
      $region12: #{tpu_custom_call.1} parent=5 // pred_fallthru
        _
      %p164 = scmp.lt.s32.totalorder %s18, 4
      // Predicated region
      $region13: #{tpu_custom_call.1} parent=5 // pred_check
        %p165 = pneg %p164
      $region14: #{tpu_custom_call.1} parent=5 // pred_check_branch
        %167 = sbr.rel (%p165) target = $region16
      $region15: #{tpu_custom_call.1} parent=5 // pred_region
        // Predicated region
        $region17: #{tpu_custom_call.1} parent=15 // pred_check
          %p168 = pneg %p59
        $region18: #{tpu_custom_call.1} parent=15 // pred_check_branch
          %170 = sbr.rel (%p168) target = $region20
        $region19: #{tpu_custom_call.1} parent=15 // pred_region
          #allocation14 [shape = 'u32[6]{0}', space=smem, size = 0x18, scoped, tag = 'DMA stride descriptor']
          %s171 = sand.u32 %s49, 1
          %s172 = scalar_lea.sflag [#allocation7], %s171
          %s173 = sand.u32 %s49, 1
          %s174 = smul.addr %s173, 128
          %s175 = scalar_lea.vmem [#allocation6], %s174
          %s176 = smul.u32 4, %s25
          %s178 = ssub.s32 2048, 2048
          %179 = vsyncadd %s172, %s178
          %s180 = smul.addr %s176, 24
          %s181 = sadd.s32 %s26, %s180
          %s182 = smul.addr %s181, 128
          %s183 = scalar_lea.hbm %s0, %s182
          %s185 = sshll.u32 1, 14
          %s186 = sxor.u32 4294967295, %s185
          %s188 = sld [smem:[#allocation0]]
          %s189 = sadd.s32 2, %s188
          %s191 = sshll.u32 7, 26
          %s192 = sxor.u32 4294967295, %s191
          %s193 = sand.u32 0, %s192
          %s194 = sshll.u32 %s189, 26
          %s195 = sor.u32 %s193, %s194
          %s196 = sshll.u32 %s175, 4
          %s197 = int_to_ptr.vmem [resolvable:$true] %s196
          %203 = sst [smem:[#allocation14]] 3072
          %s204 = scalar_lea.smem [#allocation14], 1
          %205 = sst [smem:[%s204]] 512
          %s206 = scalar_lea.smem [#allocation14], 2
          %207 = sst [smem:[%s206]] 4
          %s208 = scalar_lea.smem [#allocation14], 3
          %209 = sst [smem:[%s208]] 256
          %s210 = scalar_lea.smem [#allocation14], 4
          %211 = sst [smem:[%s210]] 128
          %s212 = scalar_lea.smem [#allocation14], 5
          %213 = sst [smem:[%s212]] 8
          %215 = dma.general %s183, 2048, %s197, %s172, [#allocation13], [#allocation14], %s195, 0
        $region20: #{tpu_custom_call.1} parent=15 // pred_fallthru
          _
        // Predicated region
        $region21: #{tpu_custom_call.1} parent=15 // pred_check
          %p216 = pneg %p87
        $region22: #{tpu_custom_call.1} parent=15 // pred_check_branch
          %218 = sbr.rel (%p216) target = $region24
        $region23: #{tpu_custom_call.1} parent=15 // pred_region
          #allocation16 [shape = 'u32[6]{0}', space=smem, size = 0x18, scoped, tag = 'DMA stride descriptor']
          %s219 = sand.u32 %s18, 1
          %s220 = scalar_lea.sflag [#allocation10], %s219
          %s221 = sand.u32 %s77, 1
          %s222 = smul.addr %s221, 128
          %s223 = scalar_lea.vmem [#allocation9], %s222
          %s224 = smul.u32 4, %s25
          %s226 = ssub.s32 2048, 2048
          %227 = vsyncadd %s220, %s226
          %s228 = sadd.s32 %s27, 8
          %s229 = smul.addr %s224, 24
          %s230 = sadd.s32 %s228, %s229
          %s231 = smul.addr %s230, 128
          %s232 = scalar_lea.hbm %s1, %s231
          %s234 = sshll.u32 1, 14
          %s235 = sxor.u32 4294967295, %s234
          %s237 = sld [smem:[#allocation0]]
          %s238 = sadd.s32 2, %s237
          %s240 = sshll.u32 7, 26
          %s241 = sxor.u32 4294967295, %s240
          %s242 = sand.u32 0, %s241
          %s243 = sshll.u32 %s238, 26
          %s244 = sor.u32 %s242, %s243
          %s245 = sshll.u32 %s223, 4
          %s246 = int_to_ptr.vmem [resolvable:$true] %s245
          %252 = sst [smem:[#allocation16]] 3072
          %s253 = scalar_lea.smem [#allocation16], 1
          %254 = sst [smem:[%s253]] 512
          %s255 = scalar_lea.smem [#allocation16], 2
          %256 = sst [smem:[%s255]] 4
          %s257 = scalar_lea.smem [#allocation16], 3
          %258 = sst [smem:[%s257]] 256
          %s259 = scalar_lea.smem [#allocation16], 4
          %260 = sst [smem:[%s259]] 128
          %s261 = scalar_lea.smem [#allocation16], 5
          %262 = sst [smem:[%s261]] 8
          %264 = dma.general %s232, 2048, %s246, %s220, [#allocation15], [#allocation16], %s244, 0
        $region24: #{tpu_custom_call.1} parent=15 // pred_fallthru
          _
        // Predicated region
        $region25: #{tpu_custom_call.1} parent=15 // pred_check
          %p265 = pneg %p115
        $region26: #{tpu_custom_call.1} parent=15 // pred_check_branch
          %267 = sbr.rel (%p265) target = $region28
        $region27: #{tpu_custom_call.1} parent=15 // pred_region
          #allocation18 [shape = 'u32[6]{0}', space=smem, size = 0x18, scoped, tag = 'DMA stride descriptor']
          %s268 = sand.u32 %s18, 1
          %s269 = scalar_lea.sflag [#allocation10], %s268
          %s270 = sand.u32 %s105, 1
          %s271 = smul.addr %s270, 128
          %s272 = scalar_lea.vmem [#allocation11], %s271
          %s273 = smul.u32 4, %s25
          %s275 = ssub.s32 2048, 2048
          %276 = vsyncadd %s269, %s275
          %s277 = sadd.s32 %s27, 16
          %s278 = smul.addr %s273, 24
          %s279 = sadd.s32 %s277, %s278
          %s280 = smul.addr %s279, 128
          %s281 = scalar_lea.hbm %s2, %s280
          %s283 = sshll.u32 1, 14
          %s284 = sxor.u32 4294967295, %s283
          %s286 = sld [smem:[#allocation0]]
          %s287 = sadd.s32 2, %s286
          %s289 = sshll.u32 7, 26
          %s290 = sxor.u32 4294967295, %s289
          %s291 = sand.u32 0, %s290
          %s292 = sshll.u32 %s287, 26
          %s293 = sor.u32 %s291, %s292
          %s294 = sshll.u32 %s272, 4
          %s295 = int_to_ptr.vmem [resolvable:$true] %s294
          %301 = sst [smem:[#allocation18]] 3072
          %s302 = scalar_lea.smem [#allocation18], 1
          %303 = sst [smem:[%s302]] 512
          %s304 = scalar_lea.smem [#allocation18], 2
          %305 = sst [smem:[%s304]] 4
          %s306 = scalar_lea.smem [#allocation18], 3
          %307 = sst [smem:[%s306]] 256
          %s308 = scalar_lea.smem [#allocation18], 4
          %309 = sst [smem:[%s308]] 128
          %s310 = scalar_lea.smem [#allocation18], 5
          %311 = sst [smem:[%s310]] 8
          %313 = dma.general %s281, 2048, %s295, %s269, [#allocation17], [#allocation18], %s293, 0
        $region28: #{tpu_custom_call.1} parent=15 // pred_fallthru
          _
      $region16: #{tpu_custom_call.1} parent=5 // pred_fallthru
        _
      %p314 = scmp.le.s32.totalorder 1, %s18
      %p315 = scmp.lt.s32.totalorder %s18, 5
      %p316 = pnand %p314, %p315
      %p317 = pneg %p316
      // Predicated region
      $region29: #{tpu_custom_call.1} parent=5 // pred_check
        _
      $region30: #{tpu_custom_call.1} parent=5 // pred_check_branch
        %319 = sbr.rel (%p316) target = $region32
      $region31: #{tpu_custom_call.1} parent=5 // pred_region
        %s320 = ssub.s32 %s18, 1
        %s321 = sand.u32 %s52, 1
        %s322 = scalar_lea.sflag [#allocation7], %s321
        %s323 = sand.u32 %s52, 1
        %s324 = smul.addr %s323, 128
        %s325 = scalar_lea.vmem [#allocation6], %s324
        // Predicated region
        $region33: #{tpu_custom_call.1} parent=31 // pred_check
          %p326 = pneg %p65
        $region34: #{tpu_custom_call.1} parent=31 // pred_check_branch
          %328 = sbr.rel (%p326) target = $region36
        $region35: #{tpu_custom_call.1} parent=31 // pred_region
          %329 = dma.done %s322, 2048
        $region36: #{tpu_custom_call.1} parent=31 // pred_fallthru
          _
        %s330 = sand.u32 %s23, 1
        %s331 = scalar_lea.sflag [#allocation10], %s330
        %s332 = sand.u32 %s80, 1
        %s333 = smul.addr %s332, 128
        %s334 = scalar_lea.vmem [#allocation9], %s333
        // Predicated region
        $region37: #{tpu_custom_call.1} parent=31 // pred_check
          %p335 = pneg %p93
        $region38: #{tpu_custom_call.1} parent=31 // pred_check_branch
          %337 = sbr.rel (%p335) target = $region40
        $region39: #{tpu_custom_call.1} parent=31 // pred_region
          %338 = dma.done %s331, 2048
        $region40: #{tpu_custom_call.1} parent=31 // pred_fallthru
          _
        %s339 = sand.u32 %s23, 1
        %s340 = scalar_lea.sflag [#allocation10], %s339
        %s341 = sand.u32 %s108, 1
        %s342 = smul.addr %s341, 128
        %s343 = scalar_lea.vmem [#allocation11], %s342
        // Predicated region
        $region41: #{tpu_custom_call.1} parent=31 // pred_check
          %p344 = pneg %p121
        $region42: #{tpu_custom_call.1} parent=31 // pred_check_branch
          %346 = sbr.rel (%p344) target = $region44
        $region43: #{tpu_custom_call.1} parent=31 // pred_region
          %347 = dma.done %s340, 2048
        $region44: #{tpu_custom_call.1} parent=31 // pred_fallthru
          _
        %s348 = sand.u32 %s52, 1
        %s349 = scalar_lea.sflag [#allocation7], %s348
        %s350 = sand.u32 %s52, 1
        %s351 = smul.addr %s350, 128
        %s352 = scalar_lea.vmem [#allocation6], %s351
        %p353 = pneg %p65
        %p354 = pneg %p62
        %s355 = sand.u32 %s23, 1
        %s356 = scalar_lea.sflag [#allocation10], %s355
        %s357 = sand.u32 %s80, 1
        %s358 = smul.addr %s357, 128
        %s359 = scalar_lea.vmem [#allocation9], %s358
        %p360 = pneg %p93
        %p361 = pneg %p90
        %s362 = sand.u32 %s23, 1
        %s363 = scalar_lea.sflag [#allocation10], %s362
        %s364 = sand.u32 %s108, 1
        %s365 = smul.addr %s364, 128
        %s366 = scalar_lea.vmem [#allocation11], %s365
        %p367 = pneg %p121
        %p368 = pneg %p118
        %p369 = pneg %p149
        %p370 = pneg %p146
        %s371 = sand.u32 %s136, 1
        %s372 = scalar_lea.sflag [#allocation8], %s371
        %s373 = sand.u32 %s136, 1
        %s374 = smul.addr %s373, 128
        %s375 = scalar_lea.vmem [#allocation12], %s374
        %s376 = smul.u32 4, %s28
        %s377 = smul.u32 4, %s28
        %s378 = smul.u32 4, %s28
        %s379 = smul.u32 4, %s28
        %p381 = scmp.eq.s32.totalorder %s30, 0
        // Predicated region
        $region45: #{tpu_custom_call.1} parent=31 // pred_check
          %p382 = pneg %p381
        $region46: #{tpu_custom_call.1} parent=31 // pred_check_branch
          %384 = sbr.rel (%p382) target = $region48
        $region47: #{tpu_custom_call.1} parent=31 // pred_region
          %385 = vst [vmem:[#allocation3] sm:$0x1] -inf
          %386 = vst [vmem:[#allocation3 + $0x1] sm:$0x1] -inf
          %387 = vst [vmem:[#allocation3 + $0x2] sm:$0x1] -inf
          %388 = vst [vmem:[#allocation3 + $0x3] sm:$0x1] -inf
          %389 = vst [vmem:[#allocation4] sm:$0x1] 0.0
          %390 = vst [vmem:[#allocation4 + $0x1] sm:$0x1] 0.0
          %391 = vst [vmem:[#allocation4 + $0x2] sm:$0x1] 0.0
          %392 = vst [vmem:[#allocation4 + $0x3] sm:$0x1] 0.0
          %393 = vst [vmem:[#allocation5] sm:$0xff] 0.0
          %394 = vst [vmem:[#allocation5 + $0x8] sm:$0xff] 0.0
          %395 = vst [vmem:[#allocation5 + $0x10] sm:$0xff] 0.0
          %396 = vst [vmem:[#allocation5 + $0x18] sm:$0xff] 0.0
          %397 = vst [vmem:[#allocation5 + $0x20] sm:$0xff] 0.0
          %398 = vst [vmem:[#allocation5 + $0x28] sm:$0xff] 0.0
          %399 = vst [vmem:[#allocation5 + $0x30] sm:$0xff] 0.0
          %400 = vst [vmem:[#allocation5 + $0x38] sm:$0xff] 0.0
          %401 = vst [vmem:[#allocation5 + $0x40] sm:$0xff] 0.0
          %402 = vst [vmem:[#allocation5 + $0x48] sm:$0xff] 0.0
          %403 = vst [vmem:[#allocation5 + $0x50] sm:$0xff] 0.0
          %404 = vst [vmem:[#allocation5 + $0x58] sm:$0xff] 0.0
          %405 = vst [vmem:[#allocation5 + $0x60] sm:$0xff] 0.0
          %406 = vst [vmem:[#allocation5 + $0x68] sm:$0xff] 0.0
          %407 = vst [vmem:[#allocation5 + $0x70] sm:$0xff] 0.0
          %408 = vst [vmem:[#allocation5 + $0x78] sm:$0xff] 0.0
          %v409 = vld [vmem:[%s325] sm:$0xff]
          %v410 = vld [vmem:[%s325 + $0x8] sm:$0xff]
          %v411 = vld [vmem:[%s325 + $0x10] sm:$0xff]
          %v412 = vld [vmem:[%s325 + $0x18] sm:$0xff]
          %v413 = vld [vmem:[%s325 + $0x20] sm:$0xff]
          %v414 = vld [vmem:[%s325 + $0x28] sm:$0xff]
          %v415 = vld [vmem:[%s325 + $0x30] sm:$0xff]
          %v416 = vld [vmem:[%s325 + $0x38] sm:$0xff]
          %v417 = vld [vmem:[%s325 + $0x40] sm:$0xff]
          %v418 = vld [vmem:[%s325 + $0x48] sm:$0xff]
          %v419 = vld [vmem:[%s325 + $0x50] sm:$0xff]
          %v420 = vld [vmem:[%s325 + $0x58] sm:$0xff]
          %v421 = vld [vmem:[%s325 + $0x60] sm:$0xff]
          %v422 = vld [vmem:[%s325 + $0x68] sm:$0xff]
          %v423 = vld [vmem:[%s325 + $0x70] sm:$0xff]
          %v424 = vld [vmem:[%s325 + $0x78] sm:$0xff]
          %v425 = vmul.f32 %v409, 0.17677669
          %v426 = vmul.f32 %v410, 0.17677669
          %v427 = vmul.f32 %v411, 0.17677669
          %v428 = vmul.f32 %v412, 0.17677669
          %v429 = vmul.f32 %v413, 0.17677669
          %v430 = vmul.f32 %v414, 0.17677669
          %v431 = vmul.f32 %v415, 0.17677669
          %v432 = vmul.f32 %v416, 0.17677669
          %v433 = vmul.f32 %v417, 0.17677669
          %v434 = vmul.f32 %v418, 0.17677669
          %v435 = vmul.f32 %v419, 0.17677669
          %v436 = vmul.f32 %v420, 0.17677669
          %v437 = vmul.f32 %v421, 0.17677669
          %v438 = vmul.f32 %v422, 0.17677669
          %v439 = vmul.f32 %v423, 0.17677669
          %v440 = vmul.f32 %v424, 0.17677669
          %v441 = vpack.c.bf16 %v426, %v425
          %v442 = vpack.c.bf16 %v428, %v427
          %v443 = vpack.c.bf16 %v430, %v429
          %v444 = vpack.c.bf16 %v432, %v431
          %v445 = vpack.c.bf16 %v434, %v433
          %v446 = vpack.c.bf16 %v436, %v435
          %v447 = vpack.c.bf16 %v438, %v437
          %v448 = vpack.c.bf16 %v440, %v439
          %449 = vst [vmem:[#allocation2] sm:$0xff] %v441
          %450 = vst [vmem:[#allocation2 + $0x8] sm:$0xff] %v442
          %451 = vst [vmem:[#allocation2 + $0x10] sm:$0xff] %v443
          %452 = vst [vmem:[#allocation2 + $0x18] sm:$0xff] %v444
          %453 = vst [vmem:[#allocation2 + $0x20] sm:$0xff] %v445
          %454 = vst [vmem:[#allocation2 + $0x28] sm:$0xff] %v446
          %455 = vst [vmem:[#allocation2 + $0x30] sm:$0xff] %v447
          %456 = vst [vmem:[#allocation2 + $0x38] sm:$0xff] %v448
        $region48: #{tpu_custom_call.1} parent=31 // pred_fallthru
          _
        %v457 = vld [vmem:[#allocation2] sm:$0xff]
        %v458 = vld [vmem:[#allocation2 + $0x8] sm:$0xff]
        %v459 = vld [vmem:[%s334] sm:$0xff]
        %v460 = vld [vmem:[%s334 + $0x8] sm:$0xff]
        %v461 = vld [vmem:[%s334 + $0x10] sm:$0xff]
        %v462 = vld [vmem:[%s334 + $0x18] sm:$0xff]
        %v463 = vpack.c.bf16 %v460, %v459
        %v464 = vpack.c.bf16 %v462, %v461
        %v465 = vld [vmem:[%s343] sm:$0xff]
        %v466 = vld [vmem:[%s343 + $0x8] sm:$0xff]
        %v467 = vld [vmem:[%s343 + $0x10] sm:$0xff]
        %v468 = vld [vmem:[%s343 + $0x18] sm:$0xff]
        %v469 = vpack.c.bf16 %v466, %v465
        %v470 = vpack.c.bf16 %v468, %v467
        %471 = vxpose.xlu0.c.b16.start [1/8] %v463, 128
        %472 = vxpose.xlu0.c.b16.cont [2/8] %v464, 128
        %473 = vxpose.xlu0.c.b16.cont [3/8] 0, 128
        %474 = vxpose.xlu0.c.b16.cont [4/8] 0, 128
        %475 = vxpose.xlu0.c.b16.cont [5/8] 0, 128
        %476 = vxpose.xlu0.c.b16.cont [6/8] 0, 128
        %477 = vxpose.xlu0.c.b16.cont [7/8] 0, 128
        %478 = vxpose.xlu0.c.b16.end [8/8] 0, 128
        %v479 = vpop.trf.xlu0
        %v480 = vpop.trf.xlu0
        %v481 = vpop.trf.xlu0
        %v482 = vpop.trf.xlu0
        %v483 = vpop.trf.xlu0
        %v484 = vpop.trf.xlu0
        %v485 = vpop.trf.xlu0
        %v486 = vpop.trf.xlu0
        %vm487 = vcmask 261120
        %v489 = vsel %vm487, %v479, 0
        %v492 = vsel %vm487, %v480, 0
        %v495 = vsel %vm487, %v481, 0
        %v498 = vsel %vm487, %v482, 0
        %v501 = vsel %vm487, %v483, 0
        %v504 = vsel %vm487, %v484, 0
        %v507 = vsel %vm487, %v485, 0
        %v510 = vsel %vm487, %v486, 0
        %512 = vmatprep.subr.bf16.mxu0 0
        %513 = vmatpush1.bf16.msra.mxu0 %v457
        %514 = vmatprep.subr.bf16.mxu0 0
        %515 = vmatpush1.bf16.msra.mxu0 %v458
        %516 = vmatprep.subr.bf16.mxu0 0
        %517 = vmatpush1.bf16.msra.mxu0 0
        %518 = vmatprep.subr.bf16.mxu0 0
        %519 = vmatpush1.bf16.msra.mxu0 0
        %520 = vmatprep.subr.bf16.mxu0 0
        %521 = vmatpush1.bf16.msra.mxu0 0
        %522 = vmatprep.subr.bf16.mxu0 0
        %523 = vmatpush1.bf16.msra.mxu0 0
        %524 = vmatprep.subr.bf16.mxu0 0
        %525 = vmatpush1.bf16.msra.mxu0 0
        %526 = vmatprep.subr.bf16.mxu0 0
        %527 = vmatpush1.bf16.msra.mxu0 0
        %528 = vmatprep.subr.bf16.mxu0 0
        %529 = vmatpush1.bf16.msra.mxu0 0
        %530 = vmatprep.subr.bf16.mxu0 0
        %531 = vmatpush1.bf16.msra.mxu0 0
        %532 = vmatprep.subr.bf16.mxu0 0
        %533 = vmatpush1.bf16.msra.mxu0 0
        %534 = vmatprep.subr.bf16.mxu0 0
        %535 = vmatpush1.bf16.msra.mxu0 0
        %536 = vmatprep.subr.bf16.mxu0 0
        %537 = vmatpush1.bf16.msra.mxu0 0
        %538 = vmatprep.subr.bf16.mxu0 0
        %539 = vmatpush1.bf16.msra.mxu0 0
        %540 = vmatprep.subr.bf16.mxu0 0
        %541 = vmatpush1.bf16.msra.mxu0 0
        %542 = vmatprep.subr.bf16.mxu0 0
        %543 = vmatpush1.bf16.msra.mxu0 0
        %544 = vmatprep.mubr.bf16.mxu0 0
        %545 = vmatmul.mubr.bf16.gmra.mrb[0].mxu0 %v489
        %v546 = vpop.f32.mrb[0].mxu0
        %v547 = vadd.f32 0.0, %v546
        %v548 = vpop.f32.mrb[0].mxu0
        %v549 = vpop.f32.mrb[0].mxu0
        %v550 = vadd.f32 0.0, %v549
        %v551 = vpop.f32.mrb[0].mxu0
        %552 = vmatprep.mubr.bf16.mxu0 0
        %553 = vmatmul.mubr.bf16.gmra.mrb[0].mxu0 %v492
        %v554 = vpop.f32.mrb[0].mxu0
        %v555 = vadd.f32 0.0, %v554
        %v556 = vpop.f32.mrb[0].mxu0
        %v557 = vpop.f32.mrb[0].mxu0
        %v558 = vadd.f32 0.0, %v557
        %v559 = vpop.f32.mrb[0].mxu0
        %560 = vmatprep.mubr.bf16.mxu0 0
        %561 = vmatmul.mubr.bf16.gmra.mrb[0].mxu0 %v495
        %v562 = vpop.f32.mrb[0].mxu0
        %v563 = vadd.f32 0.0, %v562
        %v564 = vpop.f32.mrb[0].mxu0
        %v565 = vpop.f32.mrb[0].mxu0
        %v566 = vadd.f32 0.0, %v565
        %v567 = vpop.f32.mrb[0].mxu0
        %568 = vmatprep.mubr.bf16.mxu0 0
        %569 = vmatmul.mubr.bf16.gmra.mrb[0].mxu0 %v498
        %v570 = vpop.f32.mrb[0].mxu0
        %v571 = vadd.f32 0.0, %v570
        %v572 = vpop.f32.mrb[0].mxu0
        %v573 = vpop.f32.mrb[0].mxu0
        %v574 = vadd.f32 0.0, %v573
        %v575 = vpop.f32.mrb[0].mxu0
        %576 = vmatprep.mubr.bf16.mxu0 0
        %577 = vmatmul.mubr.bf16.gmra.mrb[0].mxu0 %v501
        %v578 = vpop.f32.mrb[0].mxu0
        %v579 = vadd.f32 0.0, %v578
        %v580 = vpop.f32.mrb[0].mxu0
        %v581 = vpop.f32.mrb[0].mxu0
        %v582 = vadd.f32 0.0, %v581
        %v583 = vpop.f32.mrb[0].mxu0
        %584 = vmatprep.mubr.bf16.mxu0 0
        %585 = vmatmul.mubr.bf16.gmra.mrb[0].mxu0 %v504
        %v586 = vpop.f32.mrb[0].mxu0
        %v587 = vadd.f32 0.0, %v586
        %v588 = vpop.f32.mrb[0].mxu0
        %v589 = vpop.f32.mrb[0].mxu0
        %v590 = vadd.f32 0.0, %v589
        %v591 = vpop.f32.mrb[0].mxu0
        %592 = vmatprep.mubr.bf16.mxu0 0
        %593 = vmatmul.mubr.bf16.gmra.mrb[0].mxu0 %v507
        %v594 = vpop.f32.mrb[0].mxu0
        %v595 = vadd.f32 0.0, %v594
        %v596 = vpop.f32.mrb[0].mxu0
        %v597 = vpop.f32.mrb[0].mxu0
        %v598 = vadd.f32 0.0, %v597
        %v599 = vpop.f32.mrb[0].mxu0
        %600 = vmatprep.mubr.bf16.mxu0 0
        %601 = vmatmul.mubr.bf16.gmra.mrb[0].mxu0 %v510
        %v602 = vpop.f32.mrb[0].mxu0
        %v603 = vadd.f32 0.0, %v602
        %v604 = vpop.f32.mrb[0].mxu0
        %v605 = vpop.f32.mrb[0].mxu0
        %v606 = vadd.f32 0.0, %v605
        %v607 = vpop.f32.mrb[0].mxu0
        %608 = vdwg.mxu0
        %v609 = vld [vmem:[#allocation3] sm:$0x1]
        %v610 = vmax.f32 %v547, %v563
        %v611 = vmax.f32 %v550, %v566
        %v612 = vmax.f32 %v555, %v571
        %v613 = vmax.f32 %v558, %v574
        %v614 = vmax.f32 %v610, %v579
        %v615 = vmax.f32 %v611, %v582
        %v616 = vmax.f32 %v612, %v587
        %v617 = vmax.f32 %v613, %v590
        %v618 = vmax.f32 %v614, %v595
        %v619 = vmax.f32 %v615, %v598
        %v620 = vmax.f32 %v616, %v603
        %v621 = vmax.f32 %v617, %v606
        %v622 = vmax.f32 %v618, %v619
        %v623 = vmax.f32 %v620, %v621
        %v624 = vmax.f32 %v622, %v623
        %v625 = vrot.slane %v624, 4
        %v626 = vmax.f32 %v624, %v625
        %v627 = vrot.slane %v626, 2
        %v628 = vmax.f32 %v626, %v627
        %v629 = vrot.slane %v628, 1
        %v630 = vmax.f32 %v628, %v629
        %v631 = vmax.f32 %v609, %v630
        %v632 = vsub.f32 %v609, %v631
        %v633 = vmul.f32 %v632, 1.442695
        %v634 = vpow.pop %v633
        %v636 = vlaneseq
        %v637 = vshrl.u32 %v636, 7
        %v638 = vsub.s32 0, %v637
        %v639 = vrot.slane %v631, %v638
        %v641 = vsub.f32 %v547, %v639
        %v642 = vsub.f32 %v550, %v639
        %v643 = vsub.f32 %v555, %v639
        %v644 = vsub.f32 %v558, %v639
        %v645 = vsub.f32 %v563, %v639
        %v646 = vsub.f32 %v566, %v639
        %v647 = vsub.f32 %v571, %v639
        %v648 = vsub.f32 %v574, %v639
        %v649 = vsub.f32 %v579, %v639
        %v650 = vsub.f32 %v582, %v639
        %v651 = vsub.f32 %v587, %v639
        %v652 = vsub.f32 %v590, %v639
        %v653 = vsub.f32 %v595, %v639
        %v654 = vsub.f32 %v598, %v639
        %v655 = vsub.f32 %v603, %v639
        %v656 = vsub.f32 %v606, %v639
        %v657 = vmul.f32 %v641, 1.442695
        %v658 = vpow.pop %v657
        %v659 = vmul.f32 %v642, 1.442695
        %v660 = vpow.pop %v659
        %v661 = vmul.f32 %v643, 1.442695
        %v662 = vpow.pop %v661
        %v663 = vmul.f32 %v644, 1.442695
        %v664 = vpow.pop %v663
        %v665 = vmul.f32 %v645, 1.442695
        %v666 = vpow.pop %v665
        %v667 = vmul.f32 %v646, 1.442695
        %v668 = vpow.pop %v667
        %v669 = vmul.f32 %v647, 1.442695
        %v670 = vpow.pop %v669
        %v671 = vmul.f32 %v648, 1.442695
        %v672 = vpow.pop %v671
        %v673 = vmul.f32 %v649, 1.442695
        %v674 = vpow.pop %v673
        %v675 = vmul.f32 %v650, 1.442695
        %v676 = vpow.pop %v675
        %v677 = vmul.f32 %v651, 1.442695
        %v678 = vpow.pop %v677
        %v679 = vmul.f32 %v652, 1.442695
        %v680 = vpow.pop %v679
        %v681 = vmul.f32 %v653, 1.442695
        %v682 = vpow.pop %v681
        %v683 = vmul.f32 %v654, 1.442695
        %v684 = vpow.pop %v683
        %v685 = vmul.f32 %v655, 1.442695
        %v686 = vpow.pop %v685
        %v687 = vmul.f32 %v656, 1.442695
        %v688 = vpow.pop %v687
        %v689 = vld [vmem:[#allocation4] sm:$0x1]
        %v690 = vmul.f32 %v634, %v689
        %v691 = vadd.f32 %v658, %v660
        %v692 = vadd.f32 %v691, %v662
        %v693 = vadd.f32 %v692, %v664
        %v694 = vadd.f32 %v693, %v666
        %v695 = vadd.f32 %v694, %v668
        %v696 = vadd.f32 %v695, %v670
        %v697 = vadd.f32 %v696, %v672
        %v698 = vadd.f32 %v697, %v674
        %v699 = vadd.f32 %v698, %v676
        %v700 = vadd.f32 %v699, %v678
        %v701 = vadd.f32 %v700, %v680
        %v702 = vadd.f32 %v701, %v682
        %v703 = vadd.f32 %v702, %v684
        %v704 = vadd.f32 %v703, %v686
        %v705 = vadd.f32 %v704, %v688
        %v706 = vrot.slane %v705, 4
        %v707 = vadd.f32 %v705, %v706
        %v708 = vrot.slane %v707, 2
        %v709 = vadd.f32 %v707, %v708
        %v710 = vrot.slane %v709, 1
        %v711 = vadd.f32 %v709, %v710
        %v712 = vadd.f32 %v690, %v711
        %713 = vst [vmem:[#allocation4] sm:$0x1] %v712
        %714 = vst [vmem:[#allocation3] sm:$0x1] %v631
        %v715 = vpack.c.bf16 %v660, %v658
        %v716 = vpack.c.bf16 %v664, %v662
        %v717 = vpack.c.bf16 %v668, %v666
        %v718 = vpack.c.bf16 %v672, %v670
        %v719 = vpack.c.bf16 %v676, %v674
        %v720 = vpack.c.bf16 %v680, %v678
        %v721 = vpack.c.bf16 %v684, %v682
        %v722 = vpack.c.bf16 %v688, %v686
        %723 = vmatprep.subr.bf16.mxu0 0
        %724 = vmatpush1.bf16.msra.mxu0 %v715
        %725 = vmatprep.subr.bf16.mxu0 0
        %726 = vmatpush1.bf16.msra.mxu0 %v716
        %727 = vmatprep.subr.bf16.mxu0 0
        %728 = vmatpush1.bf16.msra.mxu0 %v717
        %729 = vmatprep.subr.bf16.mxu0 0
        %730 = vmatpush1.bf16.msra.mxu0 %v718
        %731 = vmatprep.subr.bf16.mxu0 0
        %732 = vmatpush1.bf16.msra.mxu0 %v719
        %733 = vmatprep.subr.bf16.mxu0 0
        %734 = vmatpush1.bf16.msra.mxu0 %v720
        %735 = vmatprep.subr.bf16.mxu0 0
        %736 = vmatpush1.bf16.msra.mxu0 %v721
        %737 = vmatprep.subr.bf16.mxu0 0
        %738 = vmatpush1.bf16.msra.mxu0 %v722
        %739 = vmatprep.subr.bf16.mxu0 0
        %740 = vmatpush1.bf16.msra.mxu0 0
        %741 = vmatprep.subr.bf16.mxu0 0
        %742 = vmatpush1.bf16.msra.mxu0 0
        %743 = vmatprep.subr.bf16.mxu0 0
        %744 = vmatpush1.bf16.msra.mxu0 0
        %745 = vmatprep.subr.bf16.mxu0 0
        %746 = vmatpush1.bf16.msra.mxu0 0
        %747 = vmatprep.subr.bf16.mxu0 0
        %748 = vmatpush1.bf16.msra.mxu0 0
        %749 = vmatprep.subr.bf16.mxu0 0
        %750 = vmatpush1.bf16.msra.mxu0 0
        %751 = vmatprep.subr.bf16.mxu0 0
        %752 = vmatpush1.bf16.msra.mxu0 0
        %753 = vmatprep.subr.bf16.mxu0 0
        %754 = vmatpush1.bf16.msra.mxu0 0
        %755 = vmatprep.mubr.bf16.mxu0 0
        %756 = vmatmul.mubr.bf16.gmra.mrb[0].mxu0 %v469
        %v757 = vpop.f32.mrb[0].mxu0
        %v758 = vadd.f32 0.0, %v757
        %v759 = vpop.f32.mrb[0].mxu0
        %v760 = vpop.f32.mrb[0].mxu0
        %v761 = vadd.f32 0.0, %v760
        %v762 = vpop.f32.mrb[0].mxu0
        %763 = vmatprep.mubr.bf16.mxu0 0
        %764 = vmatmul.mubr.bf16.gmra.mrb[0].mxu0 %v470
        %v765 = vpop.f32.mrb[0].mxu0
        %v766 = vadd.f32 0.0, %v765
        %v767 = vpop.f32.mrb[0].mxu0
        %v768 = vpop.f32.mrb[0].mxu0
        %v769 = vadd.f32 0.0, %v768
        %v770 = vpop.f32.mrb[0].mxu0
        %771 = vdwg.mxu0
        %v772 = vld [vmem:[#allocation5] sm:$0xff]
        %v773 = vld [vmem:[#allocation5 + $0x8] sm:$0xff]
        %v774 = vld [vmem:[#allocation5 + $0x10] sm:$0xff]
        %v775 = vld [vmem:[#allocation5 + $0x18] sm:$0xff]
        %v777 = vlaneseq
        %v778 = vshrl.u32 %v777, 7
        %v779 = vsub.s32 0, %v778
        %v780 = vrot.slane %v634, %v779
        %v782 = vmul.f32 %v772, %v780
        %v783 = vmul.f32 %v773, %v780
        %v784 = vmul.f32 %v774, %v780
        %v785 = vmul.f32 %v775, %v780
        %v786 = vadd.f32 %v782, %v758
        %v787 = vadd.f32 %v783, %v761
        %v788 = vadd.f32 %v784, %v766
        %v789 = vadd.f32 %v785, %v769
        %790 = vst [vmem:[#allocation5] sm:$0xff] %v786
        %791 = vst [vmem:[#allocation5 + $0x8] sm:$0xff] %v787
        %792 = vst [vmem:[#allocation5 + $0x10] sm:$0xff] %v788
        %793 = vst [vmem:[#allocation5 + $0x18] sm:$0xff] %v789
        %s794 = scalar_lea.vmem [#allocation2], 16
        %v795 = vld [vmem:[%s794] sm:$0xff]
        %v796 = vld [vmem:[%s794 + $0x8] sm:$0xff]
        %s797 = scalar_lea.vmem %s334, 32 [#allocation9]
        %v798 = vld [vmem:[%s797] sm:$0xff]
        %v799 = vld [vmem:[%s797 + $0x8] sm:$0xff]
        %v800 = vld [vmem:[%s797 + $0x10] sm:$0xff]
        %v801 = vld [vmem:[%s797 + $0x18] sm:$0xff]
        %v802 = vpack.c.bf16 %v799, %v798
        %v803 = vpack.c.bf16 %v801, %v800
        %s804 = scalar_lea.vmem %s343, 32 [#allocation11]
        %v805 = vld [vmem:[%s804] sm:$0xff]
        %v806 = vld [vmem:[%s804 + $0x8] sm:$0xff]
        %v807 = vld [vmem:[%s804 + $0x10] sm:$0xff]
        %v808 = vld [vmem:[%s804 + $0x18] sm:$0xff]
        %v809 = vpack.c.bf16 %v806, %v805
        %v810 = vpack.c.bf16 %v808, %v807
        %811 = vxpose.xlu0.c.b16.start [1/8] %v802, 128
        %812 = vxpose.xlu0.c.b16.cont [2/8] %v803, 128
        %813 = vxpose.xlu0.c.b16.cont [3/8] 0, 128
        %814 = vxpose.xlu0.c.b16.cont [4/8] 0, 128
        %815 = vxpose.xlu0.c.b16.cont [5/8] 0, 128
        %816 = vxpose.xlu0.c.b16.cont [6/8] 0, 128
        %817 = vxpose.xlu0.c.b16.cont [7/8] 0, 128
        %818 = vxpose.xlu0.c.b16.end [8/8] 0, 128
        %v819 = vpop.trf.xlu0
        %v820 = vpop.trf.xlu0
        %v821 = vpop.trf.xlu0
        %v822 = vpop.trf.xlu0
        %v823 = vpop.trf.xlu0
        %v824 = vpop.trf.xlu0
        %v825 = vpop.trf.xlu0
        %v826 = vpop.trf.xlu0
        %v828 = vsel %vm487, %v819, 0
        %v831 = vsel %vm487, %v820, 0
        %v834 = vsel %vm487, %v821, 0
        %v837 = vsel %vm487, %v822, 0
        %v840 = vsel %vm487, %v823, 0
        %v843 = vsel %vm487, %v824, 0
        %v846 = vsel %vm487, %v825, 0
        %v849 = vsel %vm487, %v826, 0
        %851 = vmatprep.subr.bf16.mxu0 0
        %852 = vmatpush1.bf16.msra.mxu0 %v795
        %853 = vmatprep.subr.bf16.mxu0 0
        %854 = vmatpush1.bf16.msra.mxu0 %v796
        %855 = vmatprep.subr.bf16.mxu0 0
        %856 = vmatpush1.bf16.msra.mxu0 0
        %857 = vmatprep.subr.bf16.mxu0 0
        %858 = vmatpush1.bf16.msra.mxu0 0
        %859 = vmatprep.subr.bf16.mxu0 0
        %860 = vmatpush1.bf16.msra.mxu0 0
        %861 = vmatprep.subr.bf16.mxu0 0
        %862 = vmatpush1.bf16.msra.mxu0 0
        %863 = vmatprep.subr.bf16.mxu0 0
        %864 = vmatpush1.bf16.msra.mxu0 0
        %865 = vmatprep.subr.bf16.mxu0 0
        %866 = vmatpush1.bf16.msra.mxu0 0
        %867 = vmatprep.subr.bf16.mxu0 0
        %868 = vmatpush1.bf16.msra.mxu0 0
        %869 = vmatprep.subr.bf16.mxu0 0
        %870 = vmatpush1.bf16.msra.mxu0 0
        %871 = vmatprep.subr.bf16.mxu0 0
        %872 = vmatpush1.bf16.msra.mxu0 0
        %873 = vmatprep.subr.bf16.mxu0 0
        %874 = vmatpush1.bf16.msra.mxu0 0
        %875 = vmatprep.subr.bf16.mxu0 0
        %876 = vmatpush1.bf16.msra.mxu0 0
        %877 = vmatprep.subr.bf16.mxu0 0
        %878 = vmatpush1.bf16.msra.mxu0 0
        %879 = vmatprep.subr.bf16.mxu0 0
        %880 = vmatpush1.bf16.msra.mxu0 0
        %881 = vmatprep.subr.bf16.mxu0 0
        %882 = vmatpush1.bf16.msra.mxu0 0
        %883 = vmatprep.mubr.bf16.mxu0 0
        %884 = vmatmul.mubr.bf16.gmra.mrb[0].mxu0 %v828
        %v885 = vpop.f32.mrb[0].mxu0
        %v886 = vadd.f32 0.0, %v885
        %v887 = vpop.f32.mrb[0].mxu0
        %v888 = vpop.f32.mrb[0].mxu0
        %v889 = vadd.f32 0.0, %v888
        %v890 = vpop.f32.mrb[0].mxu0
        %891 = vmatprep.mubr.bf16.mxu0 0
        %892 = vmatmul.mubr.bf16.gmra.mrb[0].mxu0 %v831
        %v893 = vpop.f32.mrb[0].mxu0
        %v894 = vadd.f32 0.0, %v893
        %v895 = vpop.f32.mrb[0].mxu0
        %v896 = vpop.f32.mrb[0].mxu0
        %v897 = vadd.f32 0.0, %v896
        %v898 = vpop.f32.mrb[0].mxu0
        %899 = vmatprep.mubr.bf16.mxu0 0
        %900 = vmatmul.mubr.bf16.gmra.mrb[0].mxu0 %v834
        %v901 = vpop.f32.mrb[0].mxu0
        %v902 = vadd.f32 0.0, %v901
        %v903 = vpop.f32.mrb[0].mxu0
        %v904 = vpop.f32.mrb[0].mxu0
        %v905 = vadd.f32 0.0, %v904
        %v906 = vpop.f32.mrb[0].mxu0
        %907 = vmatprep.mubr.bf16.mxu0 0
        %908 = vmatmul.mubr.bf16.gmra.mrb[0].mxu0 %v837
        %v909 = vpop.f32.mrb[0].mxu0
        %v910 = vadd.f32 0.0, %v909
        %v911 = vpop.f32.mrb[0].mxu0
        %v912 = vpop.f32.mrb[0].mxu0
        %v913 = vadd.f32 0.0, %v912
        %v914 = vpop.f32.mrb[0].mxu0
        %915 = vmatprep.mubr.bf16.mxu0 0
        %916 = vmatmul.mubr.bf16.gmra.mrb[0].mxu0 %v840
        %v917 = vpop.f32.mrb[0].mxu0
        %v918 = vadd.f32 0.0, %v917
        %v919 = vpop.f32.mrb[0].mxu0
        %v920 = vpop.f32.mrb[0].mxu0
        %v921 = vadd.f32 0.0, %v920
        %v922 = vpop.f32.mrb[0].mxu0
        %923 = vmatprep.mubr.bf16.mxu0 0
        %924 = vmatmul.mubr.bf16.gmra.mrb[0].mxu0 %v843
        %v925 = vpop.f32.mrb[0].mxu0
        %v926 = vadd.f32 0.0, %v925
        %v927 = vpop.f32.mrb[0].mxu0
        %v928 = vpop.f32.mrb[0].mxu0
        %v929 = vadd.f32 0.0, %v928
        %v930 = vpop.f32.mrb[0].mxu0
        %931 = vmatprep.mubr.bf16.mxu0 0
        %932 = vmatmul.mubr.bf16.gmra.mrb[0].mxu0 %v846
        %v933 = vpop.f32.mrb[0].mxu0
        %v934 = vadd.f32 0.0, %v933
        %v935 = vpop.f32.mrb[0].mxu0
        %v936 = vpop.f32.mrb[0].mxu0
        %v937 = vadd.f32 0.0, %v936
        %v938 = vpop.f32.mrb[0].mxu0
        %939 = vmatprep.mubr.bf16.mxu0 0
        %940 = vmatmul.mubr.bf16.gmra.mrb[0].mxu0 %v849
        %v941 = vpop.f32.mrb[0].mxu0
        %v942 = vadd.f32 0.0, %v941
        %v943 = vpop.f32.mrb[0].mxu0
        %v944 = vpop.f32.mrb[0].mxu0
        %v945 = vadd.f32 0.0, %v944
        %v946 = vpop.f32.mrb[0].mxu0
        %947 = vdwg.mxu0
        %s948 = scalar_lea.vmem [#allocation3], 1
        %v949 = vld [vmem:[%s948] sm:$0x1]
        %v950 = vmax.f32 %v886, %v902
        %v951 = vmax.f32 %v889, %v905
        %v952 = vmax.f32 %v894, %v910
        %v953 = vmax.f32 %v897, %v913
        %v954 = vmax.f32 %v950, %v918
        %v955 = vmax.f32 %v951, %v921
        %v956 = vmax.f32 %v952, %v926
        %v957 = vmax.f32 %v953, %v929
        %v958 = vmax.f32 %v954, %v934
        %v959 = vmax.f32 %v955, %v937
        %v960 = vmax.f32 %v956, %v942
        %v961 = vmax.f32 %v957, %v945
        %v962 = vmax.f32 %v958, %v959
        %v963 = vmax.f32 %v960, %v961
        %v964 = vmax.f32 %v962, %v963
        %v965 = vrot.slane %v964, 4
        %v966 = vmax.f32 %v964, %v965
        %v967 = vrot.slane %v966, 2
        %v968 = vmax.f32 %v966, %v967
        %v969 = vrot.slane %v968, 1
        %v970 = vmax.f32 %v968, %v969
        %v971 = vmax.f32 %v949, %v970
        %v972 = vsub.f32 %v949, %v971
        %v973 = vmul.f32 %v972, 1.442695
        %v974 = vpow.pop %v973
        %v976 = vlaneseq
        %v977 = vshrl.u32 %v976, 7
        %v978 = vsub.s32 0, %v977
        %v979 = vrot.slane %v971, %v978
        %v981 = vsub.f32 %v886, %v979
        %v982 = vsub.f32 %v889, %v979
        %v983 = vsub.f32 %v894, %v979
        %v984 = vsub.f32 %v897, %v979
        %v985 = vsub.f32 %v902, %v979
        %v986 = vsub.f32 %v905, %v979
        %v987 = vsub.f32 %v910, %v979
        %v988 = vsub.f32 %v913, %v979
        %v989 = vsub.f32 %v918, %v979
        %v990 = vsub.f32 %v921, %v979
        %v991 = vsub.f32 %v926, %v979
        %v992 = vsub.f32 %v929, %v979
        %v993 = vsub.f32 %v934, %v979
        %v994 = vsub.f32 %v937, %v979
        %v995 = vsub.f32 %v942, %v979
        %v996 = vsub.f32 %v945, %v979
        %v997 = vmul.f32 %v981, 1.442695
        %v998 = vpow.pop %v997
        %v999 = vmul.f32 %v982, 1.442695
        %v1000 = vpow.pop %v999
        %v1001 = vmul.f32 %v983, 1.442695
        %v1002 = vpow.pop %v1001
        %v1003 = vmul.f32 %v984, 1.442695
        %v1004 = vpow.pop %v1003
        %v1005 = vmul.f32 %v985, 1.442695
        %v1006 = vpow.pop %v1005
        %v1007 = vmul.f32 %v986, 1.442695
        %v1008 = vpow.pop %v1007
        %v1009 = vmul.f32 %v987, 1.442695
        %v1010 = vpow.pop %v1009
        %v1011 = vmul.f32 %v988, 1.442695
        %v1012 = vpow.pop %v1011
        %v1013 = vmul.f32 %v989, 1.442695
        %v1014 = vpow.pop %v1013
        %v1015 = vmul.f32 %v990, 1.442695
        %v1016 = vpow.pop %v1015
        %v1017 = vmul.f32 %v991, 1.442695
        %v1018 = vpow.pop %v1017
        %v1019 = vmul.f32 %v992, 1.442695
        %v1020 = vpow.pop %v1019
        %v1021 = vmul.f32 %v993, 1.442695
        %v1022 = vpow.pop %v1021
        %v1023 = vmul.f32 %v994, 1.442695
        %v1024 = vpow.pop %v1023
        %v1025 = vmul.f32 %v995, 1.442695
        %v1026 = vpow.pop %v1025
        %v1027 = vmul.f32 %v996, 1.442695
        %v1028 = vpow.pop %v1027
        %s1029 = scalar_lea.vmem [#allocation4], 1
        %v1030 = vld [vmem:[%s1029] sm:$0x1]
        %v1031 = vmul.f32 %v974, %v1030
        %v1032 = vadd.f32 %v998, %v1000
        %v1033 = vadd.f32 %v1032, %v1002
        %v1034 = vadd.f32 %v1033, %v1004
        %v1035 = vadd.f32 %v1034, %v1006
        %v1036 = vadd.f32 %v1035, %v1008
        %v1037 = vadd.f32 %v1036, %v1010
        %v1038 = vadd.f32 %v1037, %v1012
        %v1039 = vadd.f32 %v1038, %v1014
        %v1040 = vadd.f32 %v1039, %v1016
        %v1041 = vadd.f32 %v1040, %v1018
        %v1042 = vadd.f32 %v1041, %v1020
        %v1043 = vadd.f32 %v1042, %v1022
        %v1044 = vadd.f32 %v1043, %v1024
        %v1045 = vadd.f32 %v1044, %v1026
        %v1046 = vadd.f32 %v1045, %v1028
        %v1047 = vrot.slane %v1046, 4
        %v1048 = vadd.f32 %v1046, %v1047
        %v1049 = vrot.slane %v1048, 2
        %v1050 = vadd.f32 %v1048, %v1049
        %v1051 = vrot.slane %v1050, 1
        %v1052 = vadd.f32 %v1050, %v1051
        %v1053 = vadd.f32 %v1031, %v1052
        %1054 = vst [vmem:[%s1029] sm:$0x1] %v1053
        %1055 = vst [vmem:[%s948] sm:$0x1] %v971
        %v1056 = vpack.c.bf16 %v1000, %v998
        %v1057 = vpack.c.bf16 %v1004, %v1002
        %v1058 = vpack.c.bf16 %v1008, %v1006
        %v1059 = vpack.c.bf16 %v1012, %v1010
        %v1060 = vpack.c.bf16 %v1016, %v1014
        %v1061 = vpack.c.bf16 %v1020, %v1018
        %v1062 = vpack.c.bf16 %v1024, %v1022
        %v1063 = vpack.c.bf16 %v1028, %v1026
        %1064 = vmatprep.subr.bf16.mxu0 0
        %1065 = vmatpush1.bf16.msra.mxu0 %v1056
        %1066 = vmatprep.subr.bf16.mxu0 0
        %1067 = vmatpush1.bf16.msra.mxu0 %v1057
        %1068 = vmatprep.subr.bf16.mxu0 0
        %1069 = vmatpush1.bf16.msra.mxu0 %v1058
        %1070 = vmatprep.subr.bf16.mxu0 0
        %1071 = vmatpush1.bf16.msra.mxu0 %v1059
        %1072 = vmatprep.subr.bf16.mxu0 0
        %1073 = vmatpush1.bf16.msra.mxu0 %v1060
        %1074 = vmatprep.subr.bf16.mxu0 0
        %1075 = vmatpush1.bf16.msra.mxu0 %v1061
        %1076 = vmatprep.subr.bf16.mxu0 0
        %1077 = vmatpush1.bf16.msra.mxu0 %v1062
        %1078 = vmatprep.subr.bf16.mxu0 0
        %1079 = vmatpush1.bf16.msra.mxu0 %v1063
        %1080 = vmatprep.subr.bf16.mxu0 0
        %1081 = vmatpush1.bf16.msra.mxu0 0
        %1082 = vmatprep.subr.bf16.mxu0 0
        %1083 = vmatpush1.bf16.msra.mxu0 0
        %1084 = vmatprep.subr.bf16.mxu0 0
        %1085 = vmatpush1.bf16.msra.mxu0 0
        %1086 = vmatprep.subr.bf16.mxu0 0
        %1087 = vmatpush1.bf16.msra.mxu0 0
        %1088 = vmatprep.subr.bf16.mxu0 0
        %1089 = vmatpush1.bf16.msra.mxu0 0
        %1090 = vmatprep.subr.bf16.mxu0 0
        %1091 = vmatpush1.bf16.msra.mxu0 0
        %1092 = vmatprep.subr.bf16.mxu0 0
        %1093 = vmatpush1.bf16.msra.mxu0 0
        %1094 = vmatprep.subr.bf16.mxu0 0
        %1095 = vmatpush1.bf16.msra.mxu0 0
        %1096 = vmatprep.mubr.bf16.mxu0 0
        %1097 = vmatmul.mubr.bf16.gmra.mrb[0].mxu0 %v809
        %v1098 = vpop.f32.mrb[0].mxu0
        %v1099 = vadd.f32 0.0, %v1098
        %v1100 = vpop.f32.mrb[0].mxu0
        %v1101 = vpop.f32.mrb[0].mxu0
        %v1102 = vadd.f32 0.0, %v1101
        %v1103 = vpop.f32.mrb[0].mxu0
        %1104 = vmatprep.mubr.bf16.mxu0 0
        %1105 = vmatmul.mubr.bf16.gmra.mrb[0].mxu0 %v810
        %v1106 = vpop.f32.mrb[0].mxu0
        %v1107 = vadd.f32 0.0, %v1106
        %v1108 = vpop.f32.mrb[0].mxu0
        %v1109 = vpop.f32.mrb[0].mxu0
        %v1110 = vadd.f32 0.0, %v1109
        %v1111 = vpop.f32.mrb[0].mxu0
        %1112 = vdwg.mxu0
        %s1113 = scalar_lea.vmem [#allocation5], 32
        %v1114 = vld [vmem:[%s1113] sm:$0xff]
        %v1115 = vld [vmem:[%s1113 + $0x8] sm:$0xff]
        %v1116 = vld [vmem:[%s1113 + $0x10] sm:$0xff]
        %v1117 = vld [vmem:[%s1113 + $0x18] sm:$0xff]
        %v1119 = vlaneseq
        %v1120 = vshrl.u32 %v1119, 7
        %v1121 = vsub.s32 0, %v1120
        %v1122 = vrot.slane %v974, %v1121
        %v1124 = vmul.f32 %v1114, %v1122
        %v1125 = vmul.f32 %v1115, %v1122
        %v1126 = vmul.f32 %v1116, %v1122
        %v1127 = vmul.f32 %v1117, %v1122
        %v1128 = vadd.f32 %v1124, %v1099
        %v1129 = vadd.f32 %v1125, %v1102
        %v1130 = vadd.f32 %v1126, %v1107
        %v1131 = vadd.f32 %v1127, %v1110
        %1132 = vst [vmem:[%s1113] sm:$0xff] %v1128
        %1133 = vst [vmem:[%s1113 + $0x8] sm:$0xff] %v1129
        %1134 = vst [vmem:[%s1113 + $0x10] sm:$0xff] %v1130
        %1135 = vst [vmem:[%s1113 + $0x18] sm:$0xff] %v1131
        %s1136 = scalar_lea.vmem [#allocation2], 32
        %v1137 = vld [vmem:[%s1136] sm:$0xff]
        %v1138 = vld [vmem:[%s1136 + $0x8] sm:$0xff]
        %s1139 = scalar_lea.vmem %s334, 64 [#allocation9]
        %v1140 = vld [vmem:[%s1139] sm:$0xff]
        %v1141 = vld [vmem:[%s1139 + $0x8] sm:$0xff]
        %v1142 = vld [vmem:[%s1139 + $0x10] sm:$0xff]
        %v1143 = vld [vmem:[%s1139 + $0x18] sm:$0xff]
        %v1144 = vpack.c.bf16 %v1141, %v1140
        %v1145 = vpack.c.bf16 %v1143, %v1142
        %s1146 = scalar_lea.vmem %s343, 64 [#allocation11]
        %v1147 = vld [vmem:[%s1146] sm:$0xff]
        %v1148 = vld [vmem:[%s1146 + $0x8] sm:$0xff]
        %v1149 = vld [vmem:[%s1146 + $0x10] sm:$0xff]
        %v1150 = vld [vmem:[%s1146 + $0x18] sm:$0xff]
        %v1151 = vpack.c.bf16 %v1148, %v1147
        %v1152 = vpack.c.bf16 %v1150, %v1149
        %1153 = vxpose.xlu0.c.b16.start [1/8] %v1144, 128
        %1154 = vxpose.xlu0.c.b16.cont [2/8] %v1145, 128
        %1155 = vxpose.xlu0.c.b16.cont [3/8] 0, 128
        %1156 = vxpose.xlu0.c.b16.cont [4/8] 0, 128
        %1157 = vxpose.xlu0.c.b16.cont [5/8] 0, 128
        %1158 = vxpose.xlu0.c.b16.cont [6/8] 0, 128
        %1159 = vxpose.xlu0.c.b16.cont [7/8] 0, 128
        %1160 = vxpose.xlu0.c.b16.end [8/8] 0, 128
        %v1161 = vpop.trf.xlu0
        %v1162 = vpop.trf.xlu0
        %v1163 = vpop.trf.xlu0
        %v1164 = vpop.trf.xlu0
        %v1165 = vpop.trf.xlu0
        %v1166 = vpop.trf.xlu0
        %v1167 = vpop.trf.xlu0
        %v1168 = vpop.trf.xlu0
        %v1170 = vsel %vm487, %v1161, 0
        %v1173 = vsel %vm487, %v1162, 0
        %v1176 = vsel %vm487, %v1163, 0
        %v1179 = vsel %vm487, %v1164, 0
        %v1182 = vsel %vm487, %v1165, 0
        %v1185 = vsel %vm487, %v1166, 0
        %v1188 = vsel %vm487, %v1167, 0
        %v1191 = vsel %vm487, %v1168, 0
        %1193 = vmatprep.subr.bf16.mxu0 0
        %1194 = vmatpush1.bf16.msra.mxu0 %v1137
        %1195 = vmatprep.subr.bf16.mxu0 0
        %1196 = vmatpush1.bf16.msra.mxu0 %v1138
        %1197 = vmatprep.subr.bf16.mxu0 0
        %1198 = vmatpush1.bf16.msra.mxu0 0
        %1199 = vmatprep.subr.bf16.mxu0 0
        %1200 = vmatpush1.bf16.msra.mxu0 0
        %1201 = vmatprep.subr.bf16.mxu0 0
        %1202 = vmatpush1.bf16.msra.mxu0 0
        %1203 = vmatprep.subr.bf16.mxu0 0
        %1204 = vmatpush1.bf16.msra.mxu0 0
        %1205 = vmatprep.subr.bf16.mxu0 0
        %1206 = vmatpush1.bf16.msra.mxu0 0
        %1207 = vmatprep.subr.bf16.mxu0 0
        %1208 = vmatpush1.bf16.msra.mxu0 0
        %1209 = vmatprep.subr.bf16.mxu0 0
        %1210 = vmatpush1.bf16.msra.mxu0 0
        %1211 = vmatprep.subr.bf16.mxu0 0
        %1212 = vmatpush1.bf16.msra.mxu0 0
        %1213 = vmatprep.subr.bf16.mxu0 0
        %1214 = vmatpush1.bf16.msra.mxu0 0
        %1215 = vmatprep.subr.bf16.mxu0 0
        %1216 = vmatpush1.bf16.msra.mxu0 0
        %1217 = vmatprep.subr.bf16.mxu0 0
        %1218 = vmatpush1.bf16.msra.mxu0 0
        %1219 = vmatprep.subr.bf16.mxu0 0
        %1220 = vmatpush1.bf16.msra.mxu0 0
        %1221 = vmatprep.subr.bf16.mxu0 0
        %1222 = vmatpush1.bf16.msra.mxu0 0
        %1223 = vmatprep.subr.bf16.mxu0 0
        %1224 = vmatpush1.bf16.msra.mxu0 0
        %1225 = vmatprep.mubr.bf16.mxu0 0
        %1226 = vmatmul.mubr.bf16.gmra.mrb[0].mxu0 %v1170
        %v1227 = vpop.f32.mrb[0].mxu0
        %v1228 = vadd.f32 0.0, %v1227
        %v1229 = vpop.f32.mrb[0].mxu0
        %v1230 = vpop.f32.mrb[0].mxu0
        %v1231 = vadd.f32 0.0, %v1230
        %v1232 = vpop.f32.mrb[0].mxu0
        %1233 = vmatprep.mubr.bf16.mxu0 0
        %1234 = vmatmul.mubr.bf16.gmra.mrb[0].mxu0 %v1173
        %v1235 = vpop.f32.mrb[0].mxu0
        %v1236 = vadd.f32 0.0, %v1235
        %v1237 = vpop.f32.mrb[0].mxu0
        %v1238 = vpop.f32.mrb[0].mxu0
        %v1239 = vadd.f32 0.0, %v1238
        %v1240 = vpop.f32.mrb[0].mxu0
        %1241 = vmatprep.mubr.bf16.mxu0 0
        %1242 = vmatmul.mubr.bf16.gmra.mrb[0].mxu0 %v1176
        %v1243 = vpop.f32.mrb[0].mxu0
        %v1244 = vadd.f32 0.0, %v1243
        %v1245 = vpop.f32.mrb[0].mxu0
        %v1246 = vpop.f32.mrb[0].mxu0
        %v1247 = vadd.f32 0.0, %v1246
        %v1248 = vpop.f32.mrb[0].mxu0
        %1249 = vmatprep.mubr.bf16.mxu0 0
        %1250 = vmatmul.mubr.bf16.gmra.mrb[0].mxu0 %v1179
        %v1251 = vpop.f32.mrb[0].mxu0
        %v1252 = vadd.f32 0.0, %v1251
        %v1253 = vpop.f32.mrb[0].mxu0
        %v1254 = vpop.f32.mrb[0].mxu0
        %v1255 = vadd.f32 0.0, %v1254
        %v1256 = vpop.f32.mrb[0].mxu0
        %1257 = vmatprep.mubr.bf16.mxu0 0
        %1258 = vmatmul.mubr.bf16.gmra.mrb[0].mxu0 %v1182
        %v1259 = vpop.f32.mrb[0].mxu0
        %v1260 = vadd.f32 0.0, %v1259
        %v1261 = vpop.f32.mrb[0].mxu0
        %v1262 = vpop.f32.mrb[0].mxu0
        %v1263 = vadd.f32 0.0, %v1262
        %v1264 = vpop.f32.mrb[0].mxu0
        %1265 = vmatprep.mubr.bf16.mxu0 0
        %1266 = vmatmul.mubr.bf16.gmra.mrb[0].mxu0 %v1185
        %v1267 = vpop.f32.mrb[0].mxu0
        %v1268 = vadd.f32 0.0, %v1267
        %v1269 = vpop.f32.mrb[0].mxu0
        %v1270 = vpop.f32.mrb[0].mxu0
        %v1271 = vadd.f32 0.0, %v1270
        %v1272 = vpop.f32.mrb[0].mxu0
        %1273 = vmatprep.mubr.bf16.mxu0 0
        %1274 = vmatmul.mubr.bf16.gmra.mrb[0].mxu0 %v1188
        %v1275 = vpop.f32.mrb[0].mxu0
        %v1276 = vadd.f32 0.0, %v1275
        %v1277 = vpop.f32.mrb[0].mxu0
        %v1278 = vpop.f32.mrb[0].mxu0
        %v1279 = vadd.f32 0.0, %v1278
        %v1280 = vpop.f32.mrb[0].mxu0
        %1281 = vmatprep.mubr.bf16.mxu0 0
        %1282 = vmatmul.mubr.bf16.gmra.mrb[0].mxu0 %v1191
        %v1283 = vpop.f32.mrb[0].mxu0
        %v1284 = vadd.f32 0.0, %v1283
        %v1285 = vpop.f32.mrb[0].mxu0
        %v1286 = vpop.f32.mrb[0].mxu0
        %v1287 = vadd.f32 0.0, %v1286
        %v1288 = vpop.f32.mrb[0].mxu0
        %1289 = vdwg.mxu0
        %s1290 = scalar_lea.vmem [#allocation3], 2
        %v1291 = vld [vmem:[%s1290] sm:$0x1]
        %v1292 = vmax.f32 %v1228, %v1244
        %v1293 = vmax.f32 %v1231, %v1247
        %v1294 = vmax.f32 %v1236, %v1252
        %v1295 = vmax.f32 %v1239, %v1255
        %v1296 = vmax.f32 %v1292, %v1260
        %v1297 = vmax.f32 %v1293, %v1263
        %v1298 = vmax.f32 %v1294, %v1268
        %v1299 = vmax.f32 %v1295, %v1271
        %v1300 = vmax.f32 %v1296, %v1276
        %v1301 = vmax.f32 %v1297, %v1279
        %v1302 = vmax.f32 %v1298, %v1284
        %v1303 = vmax.f32 %v1299, %v1287
        %v1304 = vmax.f32 %v1300, %v1301
        %v1305 = vmax.f32 %v1302, %v1303
        %v1306 = vmax.f32 %v1304, %v1305
        %v1307 = vrot.slane %v1306, 4
        %v1308 = vmax.f32 %v1306, %v1307
        %v1309 = vrot.slane %v1308, 2
        %v1310 = vmax.f32 %v1308, %v1309
        %v1311 = vrot.slane %v1310, 1
        %v1312 = vmax.f32 %v1310, %v1311
        %v1313 = vmax.f32 %v1291, %v1312
        %v1314 = vsub.f32 %v1291, %v1313
        %v1315 = vmul.f32 %v1314, 1.442695
        %v1316 = vpow.pop %v1315
        %v1318 = vlaneseq
        %v1319 = vshrl.u32 %v1318, 7
        %v1320 = vsub.s32 0, %v1319
        %v1321 = vrot.slane %v1313, %v1320
        %v1323 = vsub.f32 %v1228, %v1321
        %v1324 = vsub.f32 %v1231, %v1321
        %v1325 = vsub.f32 %v1236, %v1321
        %v1326 = vsub.f32 %v1239, %v1321
        %v1327 = vsub.f32 %v1244, %v1321
        %v1328 = vsub.f32 %v1247, %v1321
        %v1329 = vsub.f32 %v1252, %v1321
        %v1330 = vsub.f32 %v1255, %v1321
        %v1331 = vsub.f32 %v1260, %v1321
        %v1332 = vsub.f32 %v1263, %v1321
        %v1333 = vsub.f32 %v1268, %v1321
        %v1334 = vsub.f32 %v1271, %v1321
        %v1335 = vsub.f32 %v1276, %v1321
        %v1336 = vsub.f32 %v1279, %v1321
        %v1337 = vsub.f32 %v1284, %v1321
        %v1338 = vsub.f32 %v1287, %v1321
        %v1339 = vmul.f32 %v1323, 1.442695
        %v1340 = vpow.pop %v1339
        %v1341 = vmul.f32 %v1324, 1.442695
        %v1342 = vpow.pop %v1341
        %v1343 = vmul.f32 %v1325, 1.442695
        %v1344 = vpow.pop %v1343
        %v1345 = vmul.f32 %v1326, 1.442695
        %v1346 = vpow.pop %v1345
        %v1347 = vmul.f32 %v1327, 1.442695
        %v1348 = vpow.pop %v1347
        %v1349 = vmul.f32 %v1328, 1.442695
        %v1350 = vpow.pop %v1349
        %v1351 = vmul.f32 %v1329, 1.442695
        %v1352 = vpow.pop %v1351
        %v1353 = vmul.f32 %v1330, 1.442695
        %v1354 = vpow.pop %v1353
        %v1355 = vmul.f32 %v1331, 1.442695
        %v1356 = vpow.pop %v1355
        %v1357 = vmul.f32 %v1332, 1.442695
        %v1358 = vpow.pop %v1357
        %v1359 = vmul.f32 %v1333, 1.442695
        %v1360 = vpow.pop %v1359
        %v1361 = vmul.f32 %v1334, 1.442695
        %v1362 = vpow.pop %v1361
        %v1363 = vmul.f32 %v1335, 1.442695
        %v1364 = vpow.pop %v1363
        %v1365 = vmul.f32 %v1336, 1.442695
        %v1366 = vpow.pop %v1365
        %v1367 = vmul.f32 %v1337, 1.442695
        %v1368 = vpow.pop %v1367
        %v1369 = vmul.f32 %v1338, 1.442695
        %v1370 = vpow.pop %v1369
        %s1371 = scalar_lea.vmem [#allocation4], 2
        %v1372 = vld [vmem:[%s1371] sm:$0x1]
        %v1373 = vmul.f32 %v1316, %v1372
        %v1374 = vadd.f32 %v1340, %v1342
        %v1375 = vadd.f32 %v1374, %v1344
        %v1376 = vadd.f32 %v1375, %v1346
        %v1377 = vadd.f32 %v1376, %v1348
        %v1378 = vadd.f32 %v1377, %v1350
        %v1379 = vadd.f32 %v1378, %v1352
        %v1380 = vadd.f32 %v1379, %v1354
        %v1381 = vadd.f32 %v1380, %v1356
        %v1382 = vadd.f32 %v1381, %v1358
        %v1383 = vadd.f32 %v1382, %v1360
        %v1384 = vadd.f32 %v1383, %v1362
        %v1385 = vadd.f32 %v1384, %v1364
        %v1386 = vadd.f32 %v1385, %v1366
        %v1387 = vadd.f32 %v1386, %v1368
        %v1388 = vadd.f32 %v1387, %v1370
        %v1389 = vrot.slane %v1388, 4
        %v1390 = vadd.f32 %v1388, %v1389
        %v1391 = vrot.slane %v1390, 2
        %v1392 = vadd.f32 %v1390, %v1391
        %v1393 = vrot.slane %v1392, 1
        %v1394 = vadd.f32 %v1392, %v1393
        %v1395 = vadd.f32 %v1373, %v1394
        %1396 = vst [vmem:[%s1371] sm:$0x1] %v1395
        %1397 = vst [vmem:[%s1290] sm:$0x1] %v1313
        %v1398 = vpack.c.bf16 %v1342, %v1340
        %v1399 = vpack.c.bf16 %v1346, %v1344
        %v1400 = vpack.c.bf16 %v1350, %v1348
        %v1401 = vpack.c.bf16 %v1354, %v1352
        %v1402 = vpack.c.bf16 %v1358, %v1356
        %v1403 = vpack.c.bf16 %v1362, %v1360
        %v1404 = vpack.c.bf16 %v1366, %v1364
        %v1405 = vpack.c.bf16 %v1370, %v1368
        %1406 = vmatprep.subr.bf16.mxu0 0
        %1407 = vmatpush1.bf16.msra.mxu0 %v1398
        %1408 = vmatprep.subr.bf16.mxu0 0
        %1409 = vmatpush1.bf16.msra.mxu0 %v1399
        %1410 = vmatprep.subr.bf16.mxu0 0
        %1411 = vmatpush1.bf16.msra.mxu0 %v1400
        %1412 = vmatprep.subr.bf16.mxu0 0
        %1413 = vmatpush1.bf16.msra.mxu0 %v1401
        %1414 = vmatprep.subr.bf16.mxu0 0
        %1415 = vmatpush1.bf16.msra.mxu0 %v1402
        %1416 = vmatprep.subr.bf16.mxu0 0
        %1417 = vmatpush1.bf16.msra.mxu0 %v1403
        %1418 = vmatprep.subr.bf16.mxu0 0
        %1419 = vmatpush1.bf16.msra.mxu0 %v1404
        %1420 = vmatprep.subr.bf16.mxu0 0
        %1421 = vmatpush1.bf16.msra.mxu0 %v1405
        %1422 = vmatprep.subr.bf16.mxu0 0
        %1423 = vmatpush1.bf16.msra.mxu0 0
        %1424 = vmatprep.subr.bf16.mxu0 0
        %1425 = vmatpush1.bf16.msra.mxu0 0
        %1426 = vmatprep.subr.bf16.mxu0 0
        %1427 = vmatpush1.bf16.msra.mxu0 0
        %1428 = vmatprep.subr.bf16.mxu0 0
        %1429 = vmatpush1.bf16.msra.mxu0 0
        %1430 = vmatprep.subr.bf16.mxu0 0
        %1431 = vmatpush1.bf16.msra.mxu0 0
        %1432 = vmatprep.subr.bf16.mxu0 0
        %1433 = vmatpush1.bf16.msra.mxu0 0
        %1434 = vmatprep.subr.bf16.mxu0 0
        %1435 = vmatpush1.bf16.msra.mxu0 0
        %1436 = vmatprep.subr.bf16.mxu0 0
        %1437 = vmatpush1.bf16.msra.mxu0 0
        %1438 = vmatprep.mubr.bf16.mxu0 0
        %1439 = vmatmul.mubr.bf16.gmra.mrb[0].mxu0 %v1151
        %v1440 = vpop.f32.mrb[0].mxu0
        %v1441 = vadd.f32 0.0, %v1440
        %v1442 = vpop.f32.mrb[0].mxu0
        %v1443 = vpop.f32.mrb[0].mxu0
        %v1444 = vadd.f32 0.0, %v1443
        %v1445 = vpop.f32.mrb[0].mxu0
        %1446 = vmatprep.mubr.bf16.mxu0 0
        %1447 = vmatmul.mubr.bf16.gmra.mrb[0].mxu0 %v1152
        %v1448 = vpop.f32.mrb[0].mxu0
        %v1449 = vadd.f32 0.0, %v1448
        %v1450 = vpop.f32.mrb[0].mxu0
        %v1451 = vpop.f32.mrb[0].mxu0
        %v1452 = vadd.f32 0.0, %v1451
        %v1453 = vpop.f32.mrb[0].mxu0
        %1454 = vdwg.mxu0
        %s1455 = scalar_lea.vmem [#allocation5], 64
        %v1456 = vld [vmem:[%s1455] sm:$0xff]
        %v1457 = vld [vmem:[%s1455 + $0x8] sm:$0xff]
        %v1458 = vld [vmem:[%s1455 + $0x10] sm:$0xff]
        %v1459 = vld [vmem:[%s1455 + $0x18] sm:$0xff]
        %v1461 = vlaneseq
        %v1462 = vshrl.u32 %v1461, 7
        %v1463 = vsub.s32 0, %v1462
        %v1464 = vrot.slane %v1316, %v1463
        %v1466 = vmul.f32 %v1456, %v1464
        %v1467 = vmul.f32 %v1457, %v1464
        %v1468 = vmul.f32 %v1458, %v1464
        %v1469 = vmul.f32 %v1459, %v1464
        %v1470 = vadd.f32 %v1466, %v1441
        %v1471 = vadd.f32 %v1467, %v1444
        %v1472 = vadd.f32 %v1468, %v1449
        %v1473 = vadd.f32 %v1469, %v1452
        %1474 = vst [vmem:[%s1455] sm:$0xff] %v1470
        %1475 = vst [vmem:[%s1455 + $0x8] sm:$0xff] %v1471
        %1476 = vst [vmem:[%s1455 + $0x10] sm:$0xff] %v1472
        %1477 = vst [vmem:[%s1455 + $0x18] sm:$0xff] %v1473
        %s1478 = scalar_lea.vmem [#allocation2], 48
        %v1479 = vld [vmem:[%s1478] sm:$0xff]
        %v1480 = vld [vmem:[%s1478 + $0x8] sm:$0xff]
        %s1481 = scalar_lea.vmem %s334, 96 [#allocation9]
        %v1482 = vld [vmem:[%s1481] sm:$0xff]
        %v1483 = vld [vmem:[%s1481 + $0x8] sm:$0xff]
        %v1484 = vld [vmem:[%s1481 + $0x10] sm:$0xff]
        %v1485 = vld [vmem:[%s1481 + $0x18] sm:$0xff]
        %v1486 = vpack.c.bf16 %v1483, %v1482
        %v1487 = vpack.c.bf16 %v1485, %v1484
        %s1488 = scalar_lea.vmem %s343, 96 [#allocation11]
        %v1489 = vld [vmem:[%s1488] sm:$0xff]
        %v1490 = vld [vmem:[%s1488 + $0x8] sm:$0xff]
        %v1491 = vld [vmem:[%s1488 + $0x10] sm:$0xff]
        %v1492 = vld [vmem:[%s1488 + $0x18] sm:$0xff]
        %v1493 = vpack.c.bf16 %v1490, %v1489
        %v1494 = vpack.c.bf16 %v1492, %v1491
        %1495 = vxpose.xlu0.c.b16.start [1/8] %v1486, 128
        %1496 = vxpose.xlu0.c.b16.cont [2/8] %v1487, 128
        %1497 = vxpose.xlu0.c.b16.cont [3/8] 0, 128
        %1498 = vxpose.xlu0.c.b16.cont [4/8] 0, 128
        %1499 = vxpose.xlu0.c.b16.cont [5/8] 0, 128
        %1500 = vxpose.xlu0.c.b16.cont [6/8] 0, 128
        %1501 = vxpose.xlu0.c.b16.cont [7/8] 0, 128
        %1502 = vxpose.xlu0.c.b16.end [8/8] 0, 128
        %v1503 = vpop.trf.xlu0
        %v1504 = vpop.trf.xlu0
        %v1505 = vpop.trf.xlu0
        %v1506 = vpop.trf.xlu0
        %v1507 = vpop.trf.xlu0
        %v1508 = vpop.trf.xlu0
        %v1509 = vpop.trf.xlu0
        %v1510 = vpop.trf.xlu0
        %v1512 = vsel %vm487, %v1503, 0
        %v1515 = vsel %vm487, %v1504, 0
        %v1518 = vsel %vm487, %v1505, 0
        %v1521 = vsel %vm487, %v1506, 0
        %v1524 = vsel %vm487, %v1507, 0
        %v1527 = vsel %vm487, %v1508, 0
        %v1530 = vsel %vm487, %v1509, 0
        %v1533 = vsel %vm487, %v1510, 0
        %1535 = vmatprep.subr.bf16.mxu0 0
        %1536 = vmatpush1.bf16.msra.mxu0 %v1479
        %1537 = vmatprep.subr.bf16.mxu0 0
        %1538 = vmatpush1.bf16.msra.mxu0 %v1480
        %1539 = vmatprep.subr.bf16.mxu0 0
        %1540 = vmatpush1.bf16.msra.mxu0 0
        %1541 = vmatprep.subr.bf16.mxu0 0
        %1542 = vmatpush1.bf16.msra.mxu0 0
        %1543 = vmatprep.subr.bf16.mxu0 0
        %1544 = vmatpush1.bf16.msra.mxu0 0
        %1545 = vmatprep.subr.bf16.mxu0 0
        %1546 = vmatpush1.bf16.msra.mxu0 0
        %1547 = vmatprep.subr.bf16.mxu0 0
        %1548 = vmatpush1.bf16.msra.mxu0 0
        %1549 = vmatprep.subr.bf16.mxu0 0
        %1550 = vmatpush1.bf16.msra.mxu0 0
        %1551 = vmatprep.subr.bf16.mxu0 0
        %1552 = vmatpush1.bf16.msra.mxu0 0
        %1553 = vmatprep.subr.bf16.mxu0 0
        %1554 = vmatpush1.bf16.msra.mxu0 0
        %1555 = vmatprep.subr.bf16.mxu0 0
        %1556 = vmatpush1.bf16.msra.mxu0 0
        %1557 = vmatprep.subr.bf16.mxu0 0
        %1558 = vmatpush1.bf16.msra.mxu0 0
        %1559 = vmatprep.subr.bf16.mxu0 0
        %1560 = vmatpush1.bf16.msra.mxu0 0
        %1561 = vmatprep.subr.bf16.mxu0 0
        %1562 = vmatpush1.bf16.msra.mxu0 0
        %1563 = vmatprep.subr.bf16.mxu0 0
        %1564 = vmatpush1.bf16.msra.mxu0 0
        %1565 = vmatprep.subr.bf16.mxu0 0
        %1566 = vmatpush1.bf16.msra.mxu0 0
        %1567 = vmatprep.mubr.bf16.mxu0 0
        %1568 = vmatmul.mubr.bf16.gmra.mrb[0].mxu0 %v1512
        %v1569 = vpop.f32.mrb[0].mxu0
        %v1570 = vadd.f32 0.0, %v1569
        %v1571 = vpop.f32.mrb[0].mxu0
        %v1572 = vpop.f32.mrb[0].mxu0
        %v1573 = vadd.f32 0.0, %v1572
        %v1574 = vpop.f32.mrb[0].mxu0
        %1575 = vmatprep.mubr.bf16.mxu0 0
        %1576 = vmatmul.mubr.bf16.gmra.mrb[0].mxu0 %v1515
        %v1577 = vpop.f32.mrb[0].mxu0
        %v1578 = vadd.f32 0.0, %v1577
        %v1579 = vpop.f32.mrb[0].mxu0
        %v1580 = vpop.f32.mrb[0].mxu0
        %v1581 = vadd.f32 0.0, %v1580
        %v1582 = vpop.f32.mrb[0].mxu0
        %1583 = vmatprep.mubr.bf16.mxu0 0
        %1584 = vmatmul.mubr.bf16.gmra.mrb[0].mxu0 %v1518
        %v1585 = vpop.f32.mrb[0].mxu0
        %v1586 = vadd.f32 0.0, %v1585
        %v1587 = vpop.f32.mrb[0].mxu0
        %v1588 = vpop.f32.mrb[0].mxu0
        %v1589 = vadd.f32 0.0, %v1588
        %v1590 = vpop.f32.mrb[0].mxu0
        %1591 = vmatprep.mubr.bf16.mxu0 0
        %1592 = vmatmul.mubr.bf16.gmra.mrb[0].mxu0 %v1521
        %v1593 = vpop.f32.mrb[0].mxu0
        %v1594 = vadd.f32 0.0, %v1593
        %v1595 = vpop.f32.mrb[0].mxu0
        %v1596 = vpop.f32.mrb[0].mxu0
        %v1597 = vadd.f32 0.0, %v1596
        %v1598 = vpop.f32.mrb[0].mxu0
        %1599 = vmatprep.mubr.bf16.mxu0 0
        %1600 = vmatmul.mubr.bf16.gmra.mrb[0].mxu0 %v1524
        %v1601 = vpop.f32.mrb[0].mxu0
        %v1602 = vadd.f32 0.0, %v1601
        %v1603 = vpop.f32.mrb[0].mxu0
        %v1604 = vpop.f32.mrb[0].mxu0
        %v1605 = vadd.f32 0.0, %v1604
        %v1606 = vpop.f32.mrb[0].mxu0
        %1607 = vmatprep.mubr.bf16.mxu0 0
        %1608 = vmatmul.mubr.bf16.gmra.mrb[0].mxu0 %v1527
        %v1609 = vpop.f32.mrb[0].mxu0
        %v1610 = vadd.f32 0.0, %v1609
        %v1611 = vpop.f32.mrb[0].mxu0
        %v1612 = vpop.f32.mrb[0].mxu0
        %v1613 = vadd.f32 0.0, %v1612
        %v1614 = vpop.f32.mrb[0].mxu0
        %1615 = vmatprep.mubr.bf16.mxu0 0
        %1616 = vmatmul.mubr.bf16.gmra.mrb[0].mxu0 %v1530
        %v1617 = vpop.f32.mrb[0].mxu0
        %v1618 = vadd.f32 0.0, %v1617
        %v1619 = vpop.f32.mrb[0].mxu0
        %v1620 = vpop.f32.mrb[0].mxu0
        %v1621 = vadd.f32 0.0, %v1620
        %v1622 = vpop.f32.mrb[0].mxu0
        %1623 = vmatprep.mubr.bf16.mxu0 0
        %1624 = vmatmul.mubr.bf16.gmra.mrb[0].mxu0 %v1533
        %v1625 = vpop.f32.mrb[0].mxu0
        %v1626 = vadd.f32 0.0, %v1625
        %v1627 = vpop.f32.mrb[0].mxu0
        %v1628 = vpop.f32.mrb[0].mxu0
        %v1629 = vadd.f32 0.0, %v1628
        %v1630 = vpop.f32.mrb[0].mxu0
        %1631 = vdwg.mxu0
        %s1632 = scalar_lea.vmem [#allocation3], 3
        %v1633 = vld [vmem:[%s1632] sm:$0x1]
        %v1634 = vmax.f32 %v1570, %v1586
        %v1635 = vmax.f32 %v1573, %v1589
        %v1636 = vmax.f32 %v1578, %v1594
        %v1637 = vmax.f32 %v1581, %v1597
        %v1638 = vmax.f32 %v1634, %v1602
        %v1639 = vmax.f32 %v1635, %v1605
        %v1640 = vmax.f32 %v1636, %v1610
        %v1641 = vmax.f32 %v1637, %v1613
        %v1642 = vmax.f32 %v1638, %v1618
        %v1643 = vmax.f32 %v1639, %v1621
        %v1644 = vmax.f32 %v1640, %v1626
        %v1645 = vmax.f32 %v1641, %v1629
        %v1646 = vmax.f32 %v1642, %v1643
        %v1647 = vmax.f32 %v1644, %v1645
        %v1648 = vmax.f32 %v1646, %v1647
        %v1649 = vrot.slane %v1648, 4
        %v1650 = vmax.f32 %v1648, %v1649
        %v1651 = vrot.slane %v1650, 2
        %v1652 = vmax.f32 %v1650, %v1651
        %v1653 = vrot.slane %v1652, 1
        %v1654 = vmax.f32 %v1652, %v1653
        %v1655 = vmax.f32 %v1633, %v1654
        %v1656 = vsub.f32 %v1633, %v1655
        %v1657 = vmul.f32 %v1656, 1.442695
        %v1658 = vpow.pop %v1657
        %v1660 = vlaneseq
        %v1661 = vshrl.u32 %v1660, 7
        %v1662 = vsub.s32 0, %v1661
        %v1663 = vrot.slane %v1655, %v1662
        %v1665 = vsub.f32 %v1570, %v1663
        %v1666 = vsub.f32 %v1573, %v1663
        %v1667 = vsub.f32 %v1578, %v1663
        %v1668 = vsub.f32 %v1581, %v1663
        %v1669 = vsub.f32 %v1586, %v1663
        %v1670 = vsub.f32 %v1589, %v1663
        %v1671 = vsub.f32 %v1594, %v1663
        %v1672 = vsub.f32 %v1597, %v1663
        %v1673 = vsub.f32 %v1602, %v1663
        %v1674 = vsub.f32 %v1605, %v1663
        %v1675 = vsub.f32 %v1610, %v1663
        %v1676 = vsub.f32 %v1613, %v1663
        %v1677 = vsub.f32 %v1618, %v1663
        %v1678 = vsub.f32 %v1621, %v1663
        %v1679 = vsub.f32 %v1626, %v1663
        %v1680 = vsub.f32 %v1629, %v1663
        %v1681 = vmul.f32 %v1665, 1.442695
        %v1682 = vpow.pop %v1681
        %v1683 = vmul.f32 %v1666, 1.442695
        %v1684 = vpow.pop %v1683
        %v1685 = vmul.f32 %v1667, 1.442695
        %v1686 = vpow.pop %v1685
        %v1687 = vmul.f32 %v1668, 1.442695
        %v1688 = vpow.pop %v1687
        %v1689 = vmul.f32 %v1669, 1.442695
        %v1690 = vpow.pop %v1689
        %v1691 = vmul.f32 %v1670, 1.442695
        %v1692 = vpow.pop %v1691
        %v1693 = vmul.f32 %v1671, 1.442695
        %v1694 = vpow.pop %v1693
        %v1695 = vmul.f32 %v1672, 1.442695
        %v1696 = vpow.pop %v1695
        %v1697 = vmul.f32 %v1673, 1.442695
        %v1698 = vpow.pop %v1697
        %v1699 = vmul.f32 %v1674, 1.442695
        %v1700 = vpow.pop %v1699
        %v1701 = vmul.f32 %v1675, 1.442695
        %v1702 = vpow.pop %v1701
        %v1703 = vmul.f32 %v1676, 1.442695
        %v1704 = vpow.pop %v1703
        %v1705 = vmul.f32 %v1677, 1.442695
        %v1706 = vpow.pop %v1705
        %v1707 = vmul.f32 %v1678, 1.442695
        %v1708 = vpow.pop %v1707
        %v1709 = vmul.f32 %v1679, 1.442695
        %v1710 = vpow.pop %v1709
        %v1711 = vmul.f32 %v1680, 1.442695
        %v1712 = vpow.pop %v1711
        %s1713 = scalar_lea.vmem [#allocation4], 3
        %v1714 = vld [vmem:[%s1713] sm:$0x1]
        %v1715 = vmul.f32 %v1658, %v1714
        %v1716 = vadd.f32 %v1682, %v1684
        %v1717 = vadd.f32 %v1716, %v1686
        %v1718 = vadd.f32 %v1717, %v1688
        %v1719 = vadd.f32 %v1718, %v1690
        %v1720 = vadd.f32 %v1719, %v1692
        %v1721 = vadd.f32 %v1720, %v1694
        %v1722 = vadd.f32 %v1721, %v1696
        %v1723 = vadd.f32 %v1722, %v1698
        %v1724 = vadd.f32 %v1723, %v1700
        %v1725 = vadd.f32 %v1724, %v1702
        %v1726 = vadd.f32 %v1725, %v1704
        %v1727 = vadd.f32 %v1726, %v1706
        %v1728 = vadd.f32 %v1727, %v1708
        %v1729 = vadd.f32 %v1728, %v1710
        %v1730 = vadd.f32 %v1729, %v1712
        %v1731 = vrot.slane %v1730, 4
        %v1732 = vadd.f32 %v1730, %v1731
        %v1733 = vrot.slane %v1732, 2
        %v1734 = vadd.f32 %v1732, %v1733
        %v1735 = vrot.slane %v1734, 1
        %v1736 = vadd.f32 %v1734, %v1735
        %v1737 = vadd.f32 %v1715, %v1736
        %1738 = vst [vmem:[%s1713] sm:$0x1] %v1737
        %1739 = vst [vmem:[%s1632] sm:$0x1] %v1655
        %v1740 = vpack.c.bf16 %v1684, %v1682
        %v1741 = vpack.c.bf16 %v1688, %v1686
        %v1742 = vpack.c.bf16 %v1692, %v1690
        %v1743 = vpack.c.bf16 %v1696, %v1694
        %v1744 = vpack.c.bf16 %v1700, %v1698
        %v1745 = vpack.c.bf16 %v1704, %v1702
        %v1746 = vpack.c.bf16 %v1708, %v1706
        %v1747 = vpack.c.bf16 %v1712, %v1710
        %1748 = vmatprep.subr.bf16.mxu0 0
        %1749 = vmatpush1.bf16.msra.mxu0 %v1740
        %1750 = vmatprep.subr.bf16.mxu0 0
        %1751 = vmatpush1.bf16.msra.mxu0 %v1741
        %1752 = vmatprep.subr.bf16.mxu0 0
        %1753 = vmatpush1.bf16.msra.mxu0 %v1742
        %1754 = vmatprep.subr.bf16.mxu0 0
        %1755 = vmatpush1.bf16.msra.mxu0 %v1743
        %1756 = vmatprep.subr.bf16.mxu0 0
        %1757 = vmatpush1.bf16.msra.mxu0 %v1744
        %1758 = vmatprep.subr.bf16.mxu0 0
        %1759 = vmatpush1.bf16.msra.mxu0 %v1745
        %1760 = vmatprep.subr.bf16.mxu0 0
        %1761 = vmatpush1.bf16.msra.mxu0 %v1746
        %1762 = vmatprep.subr.bf16.mxu0 0
        %1763 = vmatpush1.bf16.msra.mxu0 %v1747
        %1764 = vmatprep.subr.bf16.mxu0 0
        %1765 = vmatpush1.bf16.msra.mxu0 0
        %1766 = vmatprep.subr.bf16.mxu0 0
        %1767 = vmatpush1.bf16.msra.mxu0 0
        %1768 = vmatprep.subr.bf16.mxu0 0
        %1769 = vmatpush1.bf16.msra.mxu0 0
        %1770 = vmatprep.subr.bf16.mxu0 0
        %1771 = vmatpush1.bf16.msra.mxu0 0
        %1772 = vmatprep.subr.bf16.mxu0 0
        %1773 = vmatpush1.bf16.msra.mxu0 0
        %1774 = vmatprep.subr.bf16.mxu0 0
        %1775 = vmatpush1.bf16.msra.mxu0 0
        %1776 = vmatprep.subr.bf16.mxu0 0
        %1777 = vmatpush1.bf16.msra.mxu0 0
        %1778 = vmatprep.subr.bf16.mxu0 0
        %1779 = vmatpush1.bf16.msra.mxu0 0
        %1780 = vmatprep.mubr.bf16.mxu0 0
        %1781 = vmatmul.mubr.bf16.gmra.mrb[0].mxu0 %v1493
        %v1782 = vpop.f32.mrb[0].mxu0
        %v1783 = vadd.f32 0.0, %v1782
        %v1784 = vpop.f32.mrb[0].mxu0
        %v1785 = vpop.f32.mrb[0].mxu0
        %v1786 = vadd.f32 0.0, %v1785
        %v1787 = vpop.f32.mrb[0].mxu0
        %1788 = vmatprep.mubr.bf16.mxu0 0
        %1789 = vmatmul.mubr.bf16.gmra.mrb[0].mxu0 %v1494
        %v1790 = vpop.f32.mrb[0].mxu0
        %v1791 = vadd.f32 0.0, %v1790
        %v1792 = vpop.f32.mrb[0].mxu0
        %v1793 = vpop.f32.mrb[0].mxu0
        %v1794 = vadd.f32 0.0, %v1793
        %v1795 = vpop.f32.mrb[0].mxu0
        %1796 = vdwg.mxu0
        %s1797 = scalar_lea.vmem [#allocation5], 96
        %v1798 = vld [vmem:[%s1797] sm:$0xff]
        %v1799 = vld [vmem:[%s1797 + $0x8] sm:$0xff]
        %v1800 = vld [vmem:[%s1797 + $0x10] sm:$0xff]
        %v1801 = vld [vmem:[%s1797 + $0x18] sm:$0xff]
        %v1803 = vlaneseq
        %v1804 = vshrl.u32 %v1803, 7
        %v1805 = vsub.s32 0, %v1804
        %v1806 = vrot.slane %v1658, %v1805
        %v1808 = vmul.f32 %v1798, %v1806
        %v1809 = vmul.f32 %v1799, %v1806
        %v1810 = vmul.f32 %v1800, %v1806
        %v1811 = vmul.f32 %v1801, %v1806
        %v1812 = vadd.f32 %v1808, %v1783
        %v1813 = vadd.f32 %v1809, %v1786
        %v1814 = vadd.f32 %v1810, %v1791
        %v1815 = vadd.f32 %v1811, %v1794
        %1816 = vst [vmem:[%s1797] sm:$0xff] %v1812
        %1817 = vst [vmem:[%s1797 + $0x8] sm:$0xff] %v1813
        %1818 = vst [vmem:[%s1797 + $0x10] sm:$0xff] %v1814
        %1819 = vst [vmem:[%s1797 + $0x18] sm:$0xff] %v1815
        %p1820 = scmp.eq.s32.totalorder %s30, 1
        // Predicated region
        $region49: #{tpu_custom_call.1} parent=31 // pred_check
          %p1821 = pneg %p1820
        $region50: #{tpu_custom_call.1} parent=31 // pred_check_branch
          %1823 = sbr.rel (%p1821) target = $region52
        $region51: #{tpu_custom_call.1} parent=31 // pred_region
          %v1824 = vld [vmem:[#allocation5] sm:$0xff]
          %v1825 = vld [vmem:[#allocation5 + $0x8] sm:$0xff]
          %v1826 = vld [vmem:[#allocation5 + $0x10] sm:$0xff]
          %v1827 = vld [vmem:[#allocation5 + $0x18] sm:$0xff]
          %v1828 = vld [vmem:[#allocation5 + $0x20] sm:$0xff]
          %v1829 = vld [vmem:[#allocation5 + $0x28] sm:$0xff]
          %v1830 = vld [vmem:[#allocation5 + $0x30] sm:$0xff]
          %v1831 = vld [vmem:[#allocation5 + $0x38] sm:$0xff]
          %v1832 = vld [vmem:[#allocation5 + $0x40] sm:$0xff]
          %v1833 = vld [vmem:[#allocation5 + $0x48] sm:$0xff]
          %v1834 = vld [vmem:[#allocation5 + $0x50] sm:$0xff]
          %v1835 = vld [vmem:[#allocation5 + $0x58] sm:$0xff]
          %v1836 = vld [vmem:[#allocation5 + $0x60] sm:$0xff]
          %v1837 = vld [vmem:[#allocation5 + $0x68] sm:$0xff]
          %v1838 = vld [vmem:[#allocation5 + $0x70] sm:$0xff]
          %v1839 = vld [vmem:[#allocation5 + $0x78] sm:$0xff]
          %v1840 = vld [vmem:[#allocation4] sm:$0x1]
          %v1841 = vld [vmem:[#allocation4 + $0x1] sm:$0x1]
          %v1842 = vld [vmem:[#allocation4 + $0x2] sm:$0x1]
          %v1843 = vld [vmem:[#allocation4 + $0x3] sm:$0x1]
          %v1848 = vlaneseq
          %v1849 = vshrl.u32 %v1848, 7
          %v1850 = vsub.s32 0, %v1849
          %v1851 = vrot.slane %v1840, %v1850
          %v1852 = vlaneseq
          %v1853 = vshrl.u32 %v1852, 7
          %v1854 = vsub.s32 0, %v1853
          %v1855 = vrot.slane %v1841, %v1854
          %v1856 = vlaneseq
          %v1857 = vshrl.u32 %v1856, 7
          %v1858 = vsub.s32 0, %v1857
          %v1859 = vrot.slane %v1842, %v1858
          %v1860 = vlaneseq
          %v1861 = vshrl.u32 %v1860, 7
          %v1862 = vsub.s32 0, %v1861
          %v1863 = vrot.slane %v1843, %v1862
          %v1868 = vrcp.pop %v1851
          %v1869 = vmul.f32 %v1824, %v1868
          %v1870 = vmul.f32 %v1825, %v1868
          %v1871 = vmul.f32 %v1826, %v1868
          %v1872 = vmul.f32 %v1827, %v1868
          %v1873 = vrcp.pop %v1855
          %v1874 = vmul.f32 %v1828, %v1873
          %v1875 = vmul.f32 %v1829, %v1873
          %v1876 = vmul.f32 %v1830, %v1873
          %v1877 = vmul.f32 %v1831, %v1873
          %v1878 = vrcp.pop %v1859
          %v1879 = vmul.f32 %v1832, %v1878
          %v1880 = vmul.f32 %v1833, %v1878
          %v1881 = vmul.f32 %v1834, %v1878
          %v1882 = vmul.f32 %v1835, %v1878
          %v1883 = vrcp.pop %v1863
          %v1884 = vmul.f32 %v1836, %v1883
          %v1885 = vmul.f32 %v1837, %v1883
          %v1886 = vmul.f32 %v1838, %v1883
          %v1887 = vmul.f32 %v1839, %v1883
          %1888 = vst [vmem:[%s375] sm:$0xff] %v1869
          %1889 = vst [vmem:[%s375 + $0x8] sm:$0xff] %v1870
          %1890 = vst [vmem:[%s375 + $0x10] sm:$0xff] %v1871
          %1891 = vst [vmem:[%s375 + $0x18] sm:$0xff] %v1872
          %1892 = vst [vmem:[%s375 + $0x20] sm:$0xff] %v1874
          %1893 = vst [vmem:[%s375 + $0x28] sm:$0xff] %v1875
          %1894 = vst [vmem:[%s375 + $0x30] sm:$0xff] %v1876
          %1895 = vst [vmem:[%s375 + $0x38] sm:$0xff] %v1877
          %1896 = vst [vmem:[%s375 + $0x40] sm:$0xff] %v1879
          %1897 = vst [vmem:[%s375 + $0x48] sm:$0xff] %v1880
          %1898 = vst [vmem:[%s375 + $0x50] sm:$0xff] %v1881
          %1899 = vst [vmem:[%s375 + $0x58] sm:$0xff] %v1882
          %1900 = vst [vmem:[%s375 + $0x60] sm:$0xff] %v1884
          %1901 = vst [vmem:[%s375 + $0x68] sm:$0xff] %v1885
          %1902 = vst [vmem:[%s375 + $0x70] sm:$0xff] %v1886
          %1903 = vst [vmem:[%s375 + $0x78] sm:$0xff] %v1887
        $region52: #{tpu_custom_call.1} parent=31 // pred_fallthru
          _
        %s1904 = sand.u32 %s136, 1
        %s1905 = scalar_lea.sflag [#allocation8], %s1904
        %s1906 = sand.u32 %s136, 1
        %s1907 = smul.addr %s1906, 128
        %s1908 = scalar_lea.vmem [#allocation12], %s1907
        // Predicated region
        $region53: #{tpu_custom_call.1} parent=31 // pred_check
          %p1909 = pneg %p146
        $region54: #{tpu_custom_call.1} parent=31 // pred_check_branch
          %1911 = sbr.rel (%p1909) target = $region56
        $region55: #{tpu_custom_call.1} parent=31 // pred_region
          %s1912 = smul.u32 4, %s28
          %s1914 = ssub.s32 2048, 2048
          %1915 = vsyncadd %s1905, %s1914
          %s1916 = smul.addr %s1912, 8
          %s1917 = sadd.s32 %s29, %s1916
          %s1918 = smul.addr %s1917, 128
          %s1919 = scalar_lea.hbm %s3, %s1918
          %s1920 = sshll.u32 %s1908, 4
          %s1921 = int_to_ptr.vmem [resolvable:$true] %s1920
          %1926 = dma.vmem_to_hbm [thread:$0]  %s1921, 2048, %s1919, %s1905, 128, 256, 8
        $region56: #{tpu_custom_call.1} parent=31 // pred_fallthru
          _
      $region32: #{tpu_custom_call.1} parent=5 // pred_fallthru
        _
      %p1927 = scmp.le.s32.totalorder 2, %s18
      // Predicated region
      $region57: #{tpu_custom_call.1} parent=5 // pred_check
        %p1928 = pneg %p1927
      $region58: #{tpu_custom_call.1} parent=5 // pred_check_branch
        %1930 = sbr.rel (%p1928) target = $region60
      $region59: #{tpu_custom_call.1} parent=5 // pred_region
        %s1931 = ssub.s32 %s18, 2
        // Predicated region
        $region61: #{tpu_custom_call.1} parent=59 // pred_check
          %p1932 = pneg %p152
        $region62: #{tpu_custom_call.1} parent=59 // pred_check_branch
          %1934 = sbr.rel (%p1932) target = $region64
        $region63: #{tpu_custom_call.1} parent=59 // pred_region
          %s1935 = sand.u32 %s137, 1
          %s1936 = scalar_lea.sflag [#allocation8], %s1935
          %s1937 = sand.u32 %s137, 1
          %s1938 = smul.addr %s1937, 128
          %s1939 = scalar_lea.vmem [#allocation12], %s1938
          %1940 = dma.done %s1936, 2048
        $region64: #{tpu_custom_call.1} parent=59 // pred_fallthru
          _
      $region60: #{tpu_custom_call.1} parent=5 // pred_fallthru
        _
    $region6: #{tpu_custom_call.1} parent=1 // loop_footer
      %s22 = sadd.s32 1, %s18
    $region7: #{tpu_custom_call.1} parent=1 // loop_footer_branch
      %17 = sbr.rel target = $region3
    $region8: #{tpu_custom_call.1} parent=1 // loop_exit
      _
    %1941 = vsyncpa [#allocation7], 1
    %s1942 = scalar_lea.sflag [#allocation7], 1
    %1943 = vsyncpa %s1942, 1
    %1944 = vsyncpa [#allocation10], 1
    %s1945 = scalar_lea.sflag [#allocation10], 1
    %1946 = vsyncpa %s1945, 1
    %1947 = vsyncpa [#allocation8], 1
    %s1948 = scalar_lea.sflag [#allocation8], 1
    %1949 = vsyncpa %s1948, 1

</llo_original>
